<compile_context>
chip_gen: v7x
topology: tpu7x:2x2x1
jax: 0.10.0
libtpu: 0.0.40
codegen_flags: <defaults>
</compile_context>

<pallas_src>
import functools

import jax
import jax.numpy as jnp
import numpy as np
from jax.experimental import pallas as pl
from jax.experimental.pallas import tpu as pltpu

EPS = 1e-5                     # nn.BatchNorm2d default eps
C_PAD = 128                    # lane-dense output-channel padding (vreg lane width)
TR = 512                       # row tile; >=512 rows reaches ~85% of HBM roofline
VMEM_LIMIT = 32 * 1024 * 1024  # per-step VMEM use is <1.5 MiB (double-buffered tiles), safe on
                               # v5e (16 MiB default scoped), v6e (32/128 MiB) and v7x (32/64 MiB)


def _stats_kernel(p_ref, w_ref, sum_ref, sq_ref):
    # p_ref: (TR, F) bf16 im2col tile; w_ref: (F, C_PAD) bf16 flattened flipped weights
    # sum_ref/sq_ref: (1, C_PAD) f32 global accumulators (same block for every grid step)
    y = jnp.dot(p_ref[...], w_ref[...], preferred_element_type=jnp.float32)

    @pl.when(pl.program_id(0) == 0)
    def _():
        sum_ref[...] = jnp.zeros_like(sum_ref)
        sq_ref[...] = jnp.zeros_like(sq_ref)

    sum_ref[...] += jnp.sum(y, axis=0, keepdims=True)
    sq_ref[...] += jnp.sum(y * y, axis=0, keepdims=True)


def _apply_kernel(p_ref, ws_ref, shift_ref, o_ref):
    # ws_ref already carries the folded BN scale; elementwise math stays in f32 (v5e-safe).
    y = jnp.dot(p_ref[...], ws_ref[...], preferred_element_type=jnp.float32)
    o_ref[...] = jnp.maximum(y + shift_ref[...], 0.0).astype(o_ref.dtype)


@functools.partial(jax.jit, static_argnames=("K",))
def decoder_forward(x_nchw, w_t, bias, gamma, beta, K):
    """x_nchw: (N, Cin, H, W); w_t: (Cin, Cout, K, K) PyTorch ConvTranspose2d weight."""
    del bias  # exactly cancelled by training-mode BatchNorm's per-channel mean subtraction
    N, Cin, H, W = x_nchw.shape
    Cout = w_t.shape[1]
    OH, OW = H + K - 1, W + K - 1
    R = N * OH * OW
    F = K * K * Cin
    R_pad = ((R + TR - 1) // TR) * TR
    n_tiles = R_pad // TR

    # --- glue: NCHW -> NHWC, pad, im2col (transposed conv == full correlation w/ flipped kernel)
    # TODO(synk): im2col is still materialized in HBM; moving the (kh,kw) gather into the kernel
    # (shifted-window BlockSpecs) would cut activation HBM reads further but needs a lane-dense
    # in-kernel relayout for tiny Cin.
    x = jnp.transpose(x_nchw, (0, 2, 3, 1))
    xp = jnp.pad(x, ((0, 0), (K - 1, K - 1), (K - 1, K - 1), (0, 0)))
    cols = [xp[:, kh:kh + OH, kw:kw + OW, :] for kh in range(K) for kw in range(K)]
    P = jnp.concatenate(cols, axis=-1).reshape(R, F)
    # Zero-pad rows to a multiple of TR.  Padded rows give y == 0 (no bias is added inside the
    # kernel), so global sum / sum-of-squares are unaffected and we divide by the true R.
    P = jnp.pad(P, ((0, R_pad - R), (0, 0))).astype(jnp.bfloat16)

    Wf = jnp.flip(w_t, axis=(2, 3))                                   # flip spatial taps
    Wm = jnp.transpose(Wf, (2, 3, 0, 1)).reshape(F, Cout).astype(jnp.float32)
    Wm = jnp.pad(Wm, ((0, 0), (0, C_PAD - Cout)))                     # (F, C_PAD) lane-dense

    matmul_flops = 2 * R_pad * F * C_PAD
    p_bytes = R_pad * F * 2
    w_bytes = F * C_PAD * 2

    # --- pass 1: global per-channel sum and sum-of-squares of y = P @ Wm
    ssum, ssq = pl.pallas_call(
        _stats_kernel,
        out_shape=(jax.ShapeDtypeStruct((1, C_PAD), jnp.float32),
                   jax.ShapeDtypeStruct((1, C_PAD), jnp.float32)),
        grid_spec=pltpu.PrefetchScalarGridSpec(
            num_scalar_prefetch=0,
            grid=(n_tiles,),
            in_specs=[pl.BlockSpec((TR, F), lambda i: (i, 0)),
                      pl.BlockSpec((F, C_PAD), lambda i: (0, 0))],
            out_specs=[pl.BlockSpec((1, C_PAD), lambda i: (0, 0)),
                       pl.BlockSpec((1, C_PAD), lambda i: (0, 0))]),
        compiler_params=pltpu.CompilerParams(
            dimension_semantics=("arbitrary",),          # global reduction over row tiles
            vmem_limit_bytes=VMEM_LIMIT),
        cost_estimate=pl.CostEstimate(flops=matmul_flops, transcendentals=0,
                                      bytes_accessed=p_bytes + w_bytes + 2 * C_PAD * 4),
    )(P, Wm.astype(jnp.bfloat16))

    # --- fold BatchNorm (training mode, biased variance) into per-channel scale / shift
    gamma_p = jnp.pad(gamma.astype(jnp.float32), (0, C_PAD - Cout))
    beta_p = jnp.pad(beta.astype(jnp.float32), (0, C_PAD - Cout))
    mean = ssum[0] / R
    var = jnp.maximum(ssq[0] / R - mean * mean, 0.0)
    scale = gamma_p * jax.lax.rsqrt(var + EPS)
    shift = (beta_p - mean * scale).reshape(1, C_PAD)
    w_scaled = (Wm * scale[None, :]).astype(jnp.bfloat16)            # fold BN scale into weights
    # TODO(synk): running_mean / running_var buffers of BatchNorm2d are not updated.

    # --- pass 2: recompute tile matmul, add shift, ReLU, lane-dense store
    out2d = pl.pallas_call(
        _apply_kernel,
        out_shape=jax.ShapeDtypeStruct((R_pad, C_PAD), jnp.float32),
        grid_spec=pltpu.PrefetchScalarGridSpec(
            num_scalar_prefetch=0,
            grid=(n_tiles,),
            in_specs=[pl.BlockSpec((TR, F), lambda i: (i, 0)),
                      pl.BlockSpec((F, C_PAD), lambda i: (0, 0)),
                      pl.BlockSpec((1, C_PAD), lambda i: (0, 0))],
            out_specs=pl.BlockSpec((TR, C_PAD), lambda i: (i, 0))),
        compiler_params=pltpu.CompilerParams(
            dimension_semantics=("parallel",),           # independent row tiles (v7x megacore)
            vmem_limit_bytes=VMEM_LIMIT),
        cost_estimate=pl.CostEstimate(
            flops=matmul_flops, transcendentals=0,
            bytes_accessed=p_bytes + w_bytes + C_PAD * 4 + R_pad * C_PAD * 4),
    )(P, w_scaled, shift)

    out = out2d[:R, :Cout].reshape(N, OH, OW, Cout)
    return jnp.transpose(out, (0, 3, 1, 2))              # back to NCHW like PyTorch


def reference_numpy(x, w, b, gamma, beta, K):
    """Direct (loop) ConvTranspose2d + training-mode BatchNorm2d + ReLU, all f32."""
    N, Cin, H, W = x.shape
    Cout = w.shape[1]
    OH, OW = H + K - 1, W + K - 1
    out = np.zeros((N, Cout, OH, OW), np.float32)
    for n in range(N):
        for ci in range(Cin):
            for co in range(Cout):
                for ih in range(H):
                    for iw in range(W):
                        out[n, co, ih:ih + K, iw:iw + K] += x[n, ci, ih, iw] * w[ci, co]
    out += b.reshape(1, Cout, 1, 1)
    mean = out.mean(axis=(0, 2, 3), keepdims=True)
    var = out.var(axis=(0, 2, 3), keepdims=True)   # biased, as PyTorch BN uses for normalization
    y = (out - mean) / np.sqrt(var + EPS)
    y = y * gamma.reshape(1, -1, 1, 1) + beta.reshape(1, -1, 1, 1)
    return np.maximum(y, 0.0)


if __name__ == "__main__":
    N, Cin, Cout, H, W, K = 2, 4, 8, 16, 16, 3

    key = jax.random.PRNGKey(0)
    kx, kw, kb = jax.random.split(key, 3)
    x = jax.random.normal(kx, (N, Cin, H, W), dtype=jnp.float32)
    w_t = jax.random.normal(kw, (Cin, Cout, K, K), dtype=jnp.float32) * 0.1  # ConvTranspose2d weight
    bias = jax.random.normal(kb, (Cout,), dtype=jnp.float32) * 0.1           # ConvTranspose2d bias
    gamma = jnp.ones((Cout,), dtype=jnp.float32)                             # BatchNorm2d weight init
    beta = jnp.zeros((Cout,), dtype=jnp.float32)                             # BatchNorm2d bias init

    out = decoder_forward(x, w_t, bias, gamma, beta, K)
    out = jax.block_until_ready(out)
    assert out.shape == (N, Cout, H + K - 1, W + K - 1), out.shape

    ref = reference_numpy(np.asarray(x), np.asarray(w_t), np.asarray(bias),
                          np.asarray(gamma), np.asarray(beta), K)
    # bf16 matmul operands (f32 accumulation) -> slightly looser tolerance than pure f32
    np.testing.assert_allclose(np.asarray(out), ref, rtol=3e-2, atol=3e-2)

    print("KERNEL_OK")
</pallas_src>

<mosaic_0001>
module attributes {stable_mosaic.version = 11 : i64} {
  func.func @_stats_kernel(%arg0: i32, %arg1: memref<512x36xbf16, #tpu.memory_space<vmem>>, %arg2: memref<36x128xbf16, #tpu.memory_space<vmem>>, %arg3: memref<1x128xf32, #tpu.memory_space<vmem>>, %arg4: memref<1x128xf32, #tpu.memory_space<vmem>>) attributes {dimension_semantics = [#tpu.dimension_semantics<arbitrary>], iteration_bounds = array<i64: 2>, scalar_prefetch = 0 : i64, scratch_operands = 0 : i64, tpu.core_type = #tpu.core_type<tc>, window_params = [{transform_indices = @transform_0, window_bounds = array<i64: 512, 36>}, {pipeline_mode = #tpu.pipeline_mode<synchronous>, transform_indices = @transform_1, window_bounds = array<i64: 36, 128>}, {pipeline_mode = #tpu.pipeline_mode<synchronous>, transform_indices = @transform_2, window_bounds = array<i64: 1, 128>}, {pipeline_mode = #tpu.pipeline_mode<synchronous>, transform_indices = @transform_3, window_bounds = array<i64: 1, 128>}]} {
    %c0 = arith.constant 0 : index
    %c0_0 = arith.constant 0 : index
    %0 = vector.load %arg1[%c0, %c0_0] : memref<512x36xbf16, #tpu.memory_space<vmem>>, vector<512x36xbf16>
    %c0_1 = arith.constant 0 : index
    %c0_2 = arith.constant 0 : index
    %1 = vector.load %arg2[%c0_1, %c0_2] : memref<36x128xbf16, #tpu.memory_space<vmem>>, vector<36x128xbf16>
    %cst = arith.constant dense<0.000000e+00> : vector<512x128xf32>
    %2 = tpu.matmul %0, %1, %cst {dimension_numbers = #tpu.dot_dimension_numbers<[1], [0], [0], [1], [0, 0, 1, 1], [], []>} : vector<512x36xbf16>, vector<36x128xbf16>, vector<512x128xf32> -> vector<512x128xf32>
    %c0_i32 = arith.constant 0 : i32
    %3 = arith.cmpi eq, %arg0, %c0_i32 : i32
    %4 = arith.extui %3 : i1 to i32
    %c0_i32_3 = arith.constant 0 : i32
    %5 = arith.cmpi ne, %4, %c0_i32_3 : i32
    scf.if %5 {
      %cst_14 = arith.constant 0.000000e+00 : f32
      %17 = vector.broadcast %cst_14 : f32 to vector<1x128xf32>
      %c0_15 = arith.constant 0 : index
      %c0_16 = arith.constant 0 : index
      %18 = vector.load %arg3[%c0_15, %c0_16] : memref<1x128xf32, #tpu.memory_space<vmem>>, vector<1x128xf32>
      tpu.vector_store %arg3[%c0_15, %c0_16], %17 {strides = array<i32>} : memref<1x128xf32, #tpu.memory_space<vmem>>, vector<1x128xf32>,
      %cst_17 = arith.constant 0.000000e+00 : f32
      %19 = vector.broadcast %cst_17 : f32 to vector<1x128xf32>
      %c0_18 = arith.constant 0 : index
      %c0_19 = arith.constant 0 : index
      %20 = vector.load %arg4[%c0_18, %c0_19] : memref<1x128xf32, #tpu.memory_space<vmem>>, vector<1x128xf32>
      tpu.vector_store %arg4[%c0_18, %c0_19], %19 {strides = array<i32>} : memref<1x128xf32, #tpu.memory_space<vmem>>, vector<1x128xf32>,
    } else {
    }
    %c0_4 = arith.constant 0 : index
    %c0_5 = arith.constant 0 : index
    %6 = vector.load %arg3[%c0_4, %c0_5] : memref<1x128xf32, #tpu.memory_space<vmem>>, vector<1x128xf32>
    %cst_6 = arith.constant dense<0.000000e+00> : vector<128xf32>
    %7 = vector.multi_reduction <add>, %2, %cst_6 [0] : vector<512x128xf32> to vector<128xf32>
    %8 = vector.shape_cast %7 : vector<128xf32> to vector<1x128xf32>
    %9 = arith.addf %6, %8 : vector<1x128xf32>
    %c0_7 = arith.constant 0 : index
    %c0_8 = arith.constant 0 : index
    %10 = vector.load %arg3[%c0_7, %c0_8] : memref<1x128xf32, #tpu.memory_space<vmem>>, vector<1x128xf32>
    tpu.vector_store %arg3[%c0_7, %c0_8], %9 {strides = array<i32>} : memref<1x128xf32, #tpu.memory_space<vmem>>, vector<1x128xf32>,
    %c0_9 = arith.constant 0 : index
    %c0_10 = arith.constant 0 : index
    %11 = vector.load %arg4[%c0_9, %c0_10] : memref<1x128xf32, #tpu.memory_space<vmem>>, vector<1x128xf32>
    %12 = arith.mulf %2, %2 : vector<512x128xf32>
    %cst_11 = arith.constant dense<0.000000e+00> : vector<128xf32>
    %13 = vector.multi_reduction <add>, %12, %cst_11 [0] : vector<512x128xf32> to vector<128xf32>
    %14 = vector.shape_cast %13 : vector<128xf32> to vector<1x128xf32>
    %15 = arith.addf %11, %14 : vector<1x128xf32>
    %c0_12 = arith.constant 0 : index
    %c0_13 = arith.constant 0 : index
    %16 = vector.load %arg4[%c0_12, %c0_13] : memref<1x128xf32, #tpu.memory_space<vmem>>, vector<1x128xf32>
    tpu.vector_store %arg4[%c0_12, %c0_13], %15 {strides = array<i32>} : memref<1x128xf32, #tpu.memory_space<vmem>>, vector<1x128xf32>,
    return
  }
  func.func @transform_0(%arg0: i32) -> (i32, i32) {
    %c0_i32 = arith.constant 0 : i32
    %c0_i32_0 = arith.constant 0 : i32
    return %arg0, %c0_i32 : i32, i32
  }
  func.func @transform_1(%arg0: i32) -> (i32, i32) {
    %c0_i32 = arith.constant 0 : i32
    %c0_i32_0 = arith.constant 0 : i32
    %c0_i32_1 = arith.constant 0 : i32
    return %c0_i32, %c0_i32_0 : i32, i32
  }
  func.func @transform_2(%arg0: i32) -> (i32, i32) {
    %c0_i32 = arith.constant 0 : i32
    %c0_i32_0 = arith.constant 0 : i32
    %c0_i32_1 = arith.constant 0 : i32
    return %c0_i32, %c0_i32_0 : i32, i32
  }
  func.func @transform_3(%arg0: i32) -> (i32, i32) {
    %c0_i32 = arith.constant 0 : i32
    %c0_i32_0 = arith.constant 0 : i32
    %c0_i32_1 = arith.constant 0 : i32
    return %c0_i32, %c0_i32_0 : i32, i32
  }
}

module attributes {stable_mosaic.version = 11 : i64} {
  func.func @_apply_kernel(%arg0: i32, %arg1: memref<512x36xbf16, #tpu.memory_space<vmem>>, %arg2: memref<36x128xbf16, #tpu.memory_space<vmem>>, %arg3: memref<1x128xf32, #tpu.memory_space<vmem>>, %arg4: memref<512x128xf32, #tpu.memory_space<vmem>>) attributes {dimension_semantics = [#tpu.dimension_semantics<parallel>], iteration_bounds = array<i64: 2>, scalar_prefetch = 0 : i64, scratch_operands = 0 : i64, tpu.core_type = #tpu.core_type<tc>, window_params = [{transform_indices = @transform_0, window_bounds = array<i64: 512, 36>}, {pipeline_mode = #tpu.pipeline_mode<synchronous>, transform_indices = @transform_1, window_bounds = array<i64: 36, 128>}, {pipeline_mode = #tpu.pipeline_mode<synchronous>, transform_indices = @transform_2, window_bounds = array<i64: 1, 128>}, {transform_indices = @transform_3, window_bounds = array<i64: 512, 128>}]} {
    %c0 = arith.constant 0 : index
    %c0_0 = arith.constant 0 : index
    %0 = vector.load %arg1[%c0, %c0_0] : memref<512x36xbf16, #tpu.memory_space<vmem>>, vector<512x36xbf16>
    %c0_1 = arith.constant 0 : index
    %c0_2 = arith.constant 0 : index
    %1 = vector.load %arg2[%c0_1, %c0_2] : memref<36x128xbf16, #tpu.memory_space<vmem>>, vector<36x128xbf16>
    %cst = arith.constant dense<0.000000e+00> : vector<512x128xf32>
    %2 = tpu.matmul %0, %1, %cst {dimension_numbers = #tpu.dot_dimension_numbers<[1], [0], [0], [1], [0, 0, 1, 1], [], []>} : vector<512x36xbf16>, vector<36x128xbf16>, vector<512x128xf32> -> vector<512x128xf32>
    %c0_3 = arith.constant 0 : index
    %c0_4 = arith.constant 0 : index
    %3 = vector.load %arg3[%c0_3, %c0_4] : memref<1x128xf32, #tpu.memory_space<vmem>>, vector<1x128xf32>
    %4 = vector.broadcast %3 : vector<1x128xf32> to vector<512x128xf32>
    %5 = arith.addf %2, %4 : vector<512x128xf32>
    %cst_5 = arith.constant 0.000000e+00 : f32
    %6 = vector.broadcast %cst_5 : f32 to vector<512x128xf32>
    %7 = arith.maximumf %5, %6 : vector<512x128xf32>
    %c0_6 = arith.constant 0 : index
    %c0_7 = arith.constant 0 : index
    %8 = vector.load %arg4[%c0_6, %c0_7] : memref<512x128xf32, #tpu.memory_space<vmem>>, vector<512x128xf32>
    tpu.vector_store %arg4[%c0_6, %c0_7], %7 {strides = array<i32>} : memref<512x128xf32, #tpu.memory_space<vmem>>, vector<512x128xf32>,
    return
  }
  func.func @transform_0(%arg0: i32) -> (i32, i32) {
    %c0_i32 = arith.constant 0 : i32
    %c0_i32_0 = arith.constant 0 : i32
    return %arg0, %c0_i32 : i32, i32
  }
  func.func @transform_1(%arg0: i32) -> (i32, i32) {
    %c0_i32 = arith.constant 0 : i32
    %c0_i32_0 = arith.constant 0 : i32
    %c0_i32_1 = arith.constant 0 : i32
    return %c0_i32, %c0_i32_0 : i32, i32
  }
  func.func @transform_2(%arg0: i32) -> (i32, i32) {
    %c0_i32 = arith.constant 0 : i32
    %c0_i32_0 = arith.constant 0 : i32
    %c0_i32_1 = arith.constant 0 : i32
    return %c0_i32, %c0_i32_0 : i32, i32
  }
  func.func @transform_3(%arg0: i32) -> (i32, i32) {
    %c0_i32 = arith.constant 0 : i32
    %c0_i32_0 = arith.constant 0 : i32
    return %arg0, %c0_i32 : i32, i32
  }
}

</mosaic_0001>

<llo_original>
// kernel: decoder_forward.3
$region0: #{decoder_forward.3}
  #allocation0 [shape = 'u32[]', space=smem, size = 0x4, offset = 0x4, fixed_abs, tag = 'smem constant byte address 0x4 - core index']
  #allocation1 [shape = 'u32[144,128]{1,0:T(1,128)}', space=vmem, size = 0x12000, scoped, tag = 'internal scratch']
  %s0 = inlined_call_operand.vmem [shape: bf16[1024,36], index: 0, kind: input, shape index: {}]
  %s1 = inlined_call_operand.vmem [shape: bf16[36,128], index: 1, kind: input, shape index: {}]
  %s2 = inlined_call_operand.vmem [shape: f32[1,128], index: 2, kind: input, shape index: {}]
  %s3 = inlined_call_operand.vmem [shape: f32[1024,128], index: 3, kind: output, shape index: {}]
  %s4 = sld [smem:[#allocation0]]
  $region45: #{decoder_forward.3} parent=0
    _
  %s6 = ssub.s32 1, %s4
  %s7 = scalar_select 0, %s6, %s4
  loop: start=0, step=1, limit=4
  $region2: #{decoder_forward.3} parent=0 // loop_pre_header
    _
  $region3: #{decoder_forward.3} parent=0 // loop_header
    %s9 = sphi 0, %s13
    %p10 = scmp.ge.s32.totalorder %s9, 4
    %s19 = sphi 0, %s21
    %s22 = sphi 0, %s19
    %s23 = sphi 0, %s22
    %s39 = sphi 0, %s23
    %s43 = sphi 0, %s43
    %s45 = sphi 0, %s43
    %s46 = sphi 0, %s45
    %s60 = sphi 0, %s46
    %s64 = sphi 0, %s64
    %s66 = sphi 0, %s64
    %s67 = sphi 0, %s66
    %s81 = sphi 0, %s67
    %s87 = sphi 0, %s89
    %s90 = sphi 0, %s87
    %s91 = sphi 0, %s90
    %s107 = sphi 0, %s91
  $region4: #{decoder_forward.3} parent=0 // loop_header_branch
    %12 = sbr.rel (%p10) target = $region8
  $region5: #{decoder_forward.3} parent=0 // loop_body
    %s14 = ssub.s32 %s9, 1
    %s15 = ssub.s32 %s9, 2
    %s16 = sadd.s32 %s9, 1
    %s17 = ssub.s32 %s9, %s16
    %p18 = scmp.eq.s32.totalorder %s17, 0
    %s20 = sadd.s32 %s19, 1
    %s21 = scalar_select %p18, %s19, %s20
    %p24 = pneg %p18
    %p25 = scmp.eq.s32.totalorder %s9, 1
    %p26 = por %p24, %p25
    %p27 = scmp.ne.s32.totalorder %s19, %s22
    %p28 = scmp.eq.s32.totalorder %s9, 0
    %p29 = por %p27, %p28
    %p30 = scmp.ne.s32.totalorder %s19, %s22
    %p31 = scmp.eq.s32.totalorder %s14, 1
    %p32 = por %p30, %p31
    %p33 = scmp.ne.s32.totalorder %s22, %s23
    %p34 = scmp.eq.s32.totalorder %s14, 0
    %p35 = por %p33, %p34
    %p36 = scmp.ne.s32.totalorder %s22, %s23
    %p37 = scmp.eq.s32.totalorder %s15, 1
    %p38 = por %p36, %p37
    %p40 = scmp.ne.s32.totalorder %s23, %s39
    %p41 = scmp.eq.s32.totalorder %s15, 0
    %p42 = por %p40, %p41
    %s44 = sadd.s32 %s43, 1
    %p47 = scmp.eq.s32.totalorder %s9, 1
    %p48 = scmp.ne.s32.totalorder %s43, %s45
    %p49 = scmp.eq.s32.totalorder %s9, 0
    %p50 = por %p48, %p49
    %p51 = scmp.ne.s32.totalorder %s43, %s45
    %p52 = scmp.eq.s32.totalorder %s14, 1
    %p53 = por %p51, %p52
    %p54 = scmp.ne.s32.totalorder %s45, %s46
    %p55 = scmp.eq.s32.totalorder %s14, 0
    %p56 = por %p54, %p55
    %p57 = scmp.ne.s32.totalorder %s45, %s46
    %p58 = scmp.eq.s32.totalorder %s15, 1
    %p59 = por %p57, %p58
    %p61 = scmp.ne.s32.totalorder %s46, %s60
    %p62 = scmp.eq.s32.totalorder %s15, 0
    %p63 = por %p61, %p62
    %s65 = sadd.s32 %s64, 1
    %p68 = scmp.eq.s32.totalorder %s9, 1
    %p69 = scmp.ne.s32.totalorder %s64, %s66
    %p70 = scmp.eq.s32.totalorder %s9, 0
    %p71 = por %p69, %p70
    %p72 = scmp.ne.s32.totalorder %s64, %s66
    %p73 = scmp.eq.s32.totalorder %s14, 1
    %p74 = por %p72, %p73
    %p75 = scmp.ne.s32.totalorder %s66, %s67
    %p76 = scmp.eq.s32.totalorder %s14, 0
    %p77 = por %p75, %p76
    %p78 = scmp.ne.s32.totalorder %s66, %s67
    %p79 = scmp.eq.s32.totalorder %s15, 1
    %p80 = por %p78, %p79
    %p82 = scmp.ne.s32.totalorder %s67, %s81
    %p83 = scmp.eq.s32.totalorder %s15, 0
    %p84 = por %p82, %p83
    %s85 = ssub.s32 %s9, %s16
    %p86 = scmp.eq.s32.totalorder %s85, 0
    %s88 = sadd.s32 %s87, 1
    %s89 = scalar_select %p86, %s87, %s88
    %p92 = pneg %p86
    %p93 = scmp.eq.s32.totalorder %s9, 1
    %p94 = por %p92, %p93
    %p95 = scmp.ne.s32.totalorder %s87, %s90
    %p96 = scmp.eq.s32.totalorder %s9, 0
    %p97 = por %p95, %p96
    %p98 = scmp.ne.s32.totalorder %s87, %s90
    %p99 = scmp.eq.s32.totalorder %s14, 1
    %p100 = por %p98, %p99
    %p101 = scmp.ne.s32.totalorder %s90, %s91
    %p102 = scmp.eq.s32.totalorder %s14, 0
    %p103 = por %p101, %p102
    %p104 = scmp.ne.s32.totalorder %s90, %s91
    %p105 = scmp.eq.s32.totalorder %s15, 1
    %p106 = por %p104, %p105
    %p108 = scmp.ne.s32.totalorder %s91, %s107
    %p109 = scmp.eq.s32.totalorder %s15, 0
    %p110 = por %p108, %p109
    %p111 = scmp.le.s32.totalorder 1, %s9
    %p112 = scmp.lt.s32.totalorder %s9, 3
    %p113 = pnand %p111, %p112
    %p114 = pneg %p113
    // Predicated region
    $region9: #{decoder_forward.3} parent=5 // pred_check
      _
    $region10: #{decoder_forward.3} parent=5 // pred_check_branch
      %116 = sbr.rel (%p113) target = $region12
    $region11: #{decoder_forward.3} parent=5 // pred_region
      %s117 = ssub.s32 %s9, 1
      // Predicated region
      $region13: #{decoder_forward.3} parent=11 // pred_check
        %p118 = pneg %p56
      $region14: #{decoder_forward.3} parent=11 // pred_check_branch
        %120 = sbr.rel (%p118) target = $region16
      $region15: #{decoder_forward.3} parent=11 // pred_region
        _
      $region16: #{decoder_forward.3} parent=11 // pred_fallthru
        _
      // Predicated region
      $region17: #{decoder_forward.3} parent=11 // pred_check
        %p121 = pneg %p77
      $region18: #{decoder_forward.3} parent=11 // pred_check_branch
        %123 = sbr.rel (%p121) target = $region20
      $region19: #{decoder_forward.3} parent=11 // pred_region
        _
      $region20: #{decoder_forward.3} parent=11 // pred_fallthru
        _
    $region12: #{decoder_forward.3} parent=5 // pred_fallthru
      _
    %p124 = scmp.lt.s32.totalorder %s9, 2
    // Predicated region
    $region21: #{decoder_forward.3} parent=5 // pred_check
      %p125 = pneg %p124
    $region22: #{decoder_forward.3} parent=5 // pred_check_branch
      %127 = sbr.rel (%p125) target = $region24
    $region23: #{decoder_forward.3} parent=5 // pred_region
      // Predicated region
      $region25: #{decoder_forward.3} parent=23 // pred_check
        %p128 = pneg %p29
      $region26: #{decoder_forward.3} parent=23 // pred_check_branch
        %130 = sbr.rel (%p128) target = $region28
      $region27: #{decoder_forward.3} parent=23 // pred_region
        %s131 = smul.u32 64, %s9
        %p132 = scmp.lt.s32.totalorder %s131, 127
        %s133 = scalar_select %p132, %s131, 127
        %s134 = smul.addr %s133, 4
        %s135 = scalar_lea.vmem %s0, %s134
        %s136 = smul.u32 64, %s9
      $region28: #{decoder_forward.3} parent=23 // pred_fallthru
        _
    $region24: #{decoder_forward.3} parent=5 // pred_fallthru
      _
    %p137 = scmp.le.s32.totalorder 1, %s9
    %p138 = scmp.lt.s32.totalorder %s9, 3
    %p139 = pnand %p137, %p138
    %p140 = pneg %p139
    // Predicated region
    $region29: #{decoder_forward.3} parent=5 // pred_check
      _
    $region30: #{decoder_forward.3} parent=5 // pred_check_branch
      %142 = sbr.rel (%p139) target = $region32
    $region31: #{decoder_forward.3} parent=5 // pred_region
      %s143 = ssub.s32 %s9, 1
      %s144 = smul.u32 64, %s14
      %p145 = scmp.lt.s32.totalorder %s144, 127
      %s146 = scalar_select %p145, %s144, 127
      %s147 = smul.addr %s146, 4
      %s148 = scalar_lea.vmem %s0, %s147
      %p149 = pneg %p35
      %p150 = pneg %p32
      %p151 = pneg %p56
      %p152 = pneg %p53
      %p153 = pneg %p77
      %p154 = pneg %p74
      %p155 = pneg %p103
      %p156 = pneg %p100
      %s157 = smul.u32 64, %s14
      %p158 = scmp.lt.s32.totalorder %s157, 127
      %s159 = scalar_select %p158, %s157, 127
      %s160 = smul.addr %s159, 8
      %s161 = scalar_lea.vmem %s3, %s160
      %s162 = smul.u32 64, %s14
      %p163 = scmp.lt.s32.totalorder %s162, 127
      %s164 = scalar_select %p163, %s162, 127
      %s165 = smul.addr %s164, 4
      %s166 = scalar_lea.vmem %s0, %s165
      %s167 = smul.u32 64, %s14
      %s168 = smul.u32 64, %s14
      %p169 = scmp.lt.s32.totalorder %s168, 127
      %s170 = scalar_select %p169, %s168, 127
      %s171 = smul.addr %s170, 8
      %s172 = scalar_lea.vmem %s3, %s171
      %s173 = smul.u32 64, %s14
      %v175 = vld [vmem:[%s166] sm:$0xf]
      %v176 = vld [vmem:[%s166 + $0x4] sm:$0xf]
      %v177 = vld [vmem:[%s166 + $0x8] sm:$0xf]
      %v178 = vld [vmem:[%s166 + $0xc] sm:$0xf]
      %v179 = vld [vmem:[%s166 + $0x10] sm:$0xf]
      %v180 = vld [vmem:[%s166 + $0x14] sm:$0xf]
      %v181 = vld [vmem:[%s166 + $0x18] sm:$0xf]
      %v182 = vld [vmem:[%s166 + $0x1c] sm:$0xf]
      %v183 = vld [vmem:[%s166 + $0x20] sm:$0xf]
      %v184 = vld [vmem:[%s166 + $0x24] sm:$0xf]
      %v185 = vld [vmem:[%s166 + $0x28] sm:$0xf]
      %v186 = vld [vmem:[%s166 + $0x2c] sm:$0xf]
      %v187 = vld [vmem:[%s166 + $0x30] sm:$0xf]
      %v188 = vld [vmem:[%s166 + $0x34] sm:$0xf]
      %v189 = vld [vmem:[%s166 + $0x38] sm:$0xf]
      %v190 = vld [vmem:[%s166 + $0x3c] sm:$0xf]
      %v191 = vld [vmem:[%s166 + $0x40] sm:$0xf]
      %v192 = vld [vmem:[%s166 + $0x44] sm:$0xf]
      %v193 = vld [vmem:[%s166 + $0x48] sm:$0xf]
      %v194 = vld [vmem:[%s166 + $0x4c] sm:$0xf]
      %v195 = vld [vmem:[%s166 + $0x50] sm:$0xf]
      %v196 = vld [vmem:[%s166 + $0x54] sm:$0xf]
      %v197 = vld [vmem:[%s166 + $0x58] sm:$0xf]
      %v198 = vld [vmem:[%s166 + $0x5c] sm:$0xf]
      %v199 = vld [vmem:[%s166 + $0x60] sm:$0xf]
      %v200 = vld [vmem:[%s166 + $0x64] sm:$0xf]
      %v201 = vld [vmem:[%s166 + $0x68] sm:$0xf]
      %v202 = vld [vmem:[%s166 + $0x6c] sm:$0xf]
      %v203 = vld [vmem:[%s166 + $0x70] sm:$0xf]
      %v204 = vld [vmem:[%s166 + $0x74] sm:$0xf]
      %v205 = vld [vmem:[%s166 + $0x78] sm:$0xf]
      %v206 = vld [vmem:[%s166 + $0x7c] sm:$0xf]
      %v207 = vld [vmem:[%s166 + $0x80] sm:$0xf]
      %v208 = vld [vmem:[%s166 + $0x84] sm:$0xf]
      %v209 = vld [vmem:[%s166 + $0x88] sm:$0xf]
      %v210 = vld [vmem:[%s166 + $0x8c] sm:$0xf]
      %v211 = vld [vmem:[%s166 + $0x90] sm:$0xf]
      %v212 = vld [vmem:[%s166 + $0x94] sm:$0xf]
      %v213 = vld [vmem:[%s166 + $0x98] sm:$0xf]
      %v214 = vld [vmem:[%s166 + $0x9c] sm:$0xf]
      %v215 = vld [vmem:[%s166 + $0xa0] sm:$0xf]
      %v216 = vld [vmem:[%s166 + $0xa4] sm:$0xf]
      %v217 = vld [vmem:[%s166 + $0xa8] sm:$0xf]
      %v218 = vld [vmem:[%s166 + $0xac] sm:$0xf]
      %v219 = vld [vmem:[%s166 + $0xb0] sm:$0xf]
      %v220 = vld [vmem:[%s166 + $0xb4] sm:$0xf]
      %v221 = vld [vmem:[%s166 + $0xb8] sm:$0xf]
      %v222 = vld [vmem:[%s166 + $0xbc] sm:$0xf]
      %v223 = vld [vmem:[%s166 + $0xc0] sm:$0xf]
      %v224 = vld [vmem:[%s166 + $0xc4] sm:$0xf]
      %v225 = vld [vmem:[%s166 + $0xc8] sm:$0xf]
      %v226 = vld [vmem:[%s166 + $0xcc] sm:$0xf]
      %v227 = vld [vmem:[%s166 + $0xd0] sm:$0xf]
      %v228 = vld [vmem:[%s166 + $0xd4] sm:$0xf]
      %v229 = vld [vmem:[%s166 + $0xd8] sm:$0xf]
      %v230 = vld [vmem:[%s166 + $0xdc] sm:$0xf]
      %v231 = vld [vmem:[%s166 + $0xe0] sm:$0xf]
      %v232 = vld [vmem:[%s166 + $0xe4] sm:$0xf]
      %v233 = vld [vmem:[%s166 + $0xe8] sm:$0xf]
      %v234 = vld [vmem:[%s166 + $0xec] sm:$0xf]
      %v235 = vld [vmem:[%s166 + $0xf0] sm:$0xf]
      %v236 = vld [vmem:[%s166 + $0xf4] sm:$0xf]
      %v237 = vld [vmem:[%s166 + $0xf8] sm:$0xf]
      %v238 = vld [vmem:[%s166 + $0xfc] sm:$0xf]
      %v239 = vld [vmem:[%s1] sm:$0xf]
      %v240 = vld [vmem:[%s1 + $0x4] sm:$0xf]
      %v241 = vld [vmem:[%s1 + $0x8] sm:$0xf]
      %v242 = vld [vmem:[%s1 + $0xc] sm:$0xf]
      %v243 = vld [vmem:[%s1 + $0x10] sm:$0x3]
      %v244 = vld [vmem:[%s2] sm:$0x1]
      %v246 = vlaneseq
      %v247 = vshrl.u32 %v246, 7
      %v248 = vsub.s32 0, %v247
      %v249 = vrot.slane %v244, %v248
      %v315 = vunpack.c.l.b16 %v175
      %v316 = vunpack.c.l.b16 %v176
      %v317 = vunpack.c.l.b16 %v177
      %v318 = vunpack.c.l.b16 %v178
      %v319 = vunpack.c.l.b16 %v179
      %v320 = vunpack.c.l.b16 %v180
      %v321 = vunpack.c.l.b16 %v181
      %v322 = vunpack.c.l.b16 %v182
      %v323 = vunpack.c.l.b16 %v183
      %v324 = vunpack.c.l.b16 %v184
      %v325 = vunpack.c.l.b16 %v185
      %v326 = vunpack.c.l.b16 %v186
      %v327 = vunpack.c.l.b16 %v187
      %v328 = vunpack.c.l.b16 %v188
      %v329 = vunpack.c.l.b16 %v189
      %v330 = vunpack.c.l.b16 %v190
      %v331 = vunpack.c.l.b16 %v191
      %v332 = vunpack.c.l.b16 %v192
      %v333 = vunpack.c.l.b16 %v193
      %v334 = vunpack.c.l.b16 %v194
      %v335 = vunpack.c.l.b16 %v195
      %v336 = vunpack.c.l.b16 %v196
      %v337 = vunpack.c.l.b16 %v197
      %v338 = vunpack.c.l.b16 %v198
      %v339 = vunpack.c.l.b16 %v199
      %v340 = vunpack.c.l.b16 %v200
      %v341 = vunpack.c.l.b16 %v201
      %v342 = vunpack.c.l.b16 %v202
      %v343 = vunpack.c.l.b16 %v203
      %v344 = vunpack.c.l.b16 %v204
      %v345 = vunpack.c.l.b16 %v205
      %v346 = vunpack.c.l.b16 %v206
      %v347 = vunpack.c.l.b16 %v207
      %v348 = vunpack.c.l.b16 %v208
      %v349 = vunpack.c.l.b16 %v209
      %v350 = vunpack.c.l.b16 %v210
      %v351 = vunpack.c.l.b16 %v211
      %v352 = vunpack.c.l.b16 %v212
      %v353 = vunpack.c.l.b16 %v213
      %v354 = vunpack.c.l.b16 %v214
      %v355 = vunpack.c.l.b16 %v215
      %v356 = vunpack.c.l.b16 %v216
      %v357 = vunpack.c.l.b16 %v217
      %v358 = vunpack.c.l.b16 %v218
      %v359 = vunpack.c.l.b16 %v219
      %v360 = vunpack.c.l.b16 %v220
      %v361 = vunpack.c.l.b16 %v221
      %v362 = vunpack.c.l.b16 %v222
      %v363 = vunpack.c.l.b16 %v223
      %v364 = vunpack.c.l.b16 %v224
      %v365 = vunpack.c.l.b16 %v225
      %v366 = vunpack.c.l.b16 %v226
      %v367 = vunpack.c.l.b16 %v227
      %v368 = vunpack.c.l.b16 %v228
      %v369 = vunpack.c.l.b16 %v229
      %v370 = vunpack.c.l.b16 %v230
      %v371 = vunpack.c.l.b16 %v231
      %v372 = vunpack.c.l.b16 %v232
      %v373 = vunpack.c.l.b16 %v233
      %v374 = vunpack.c.l.b16 %v234
      %v375 = vunpack.c.l.b16 %v235
      %v376 = vunpack.c.l.b16 %v236
      %v377 = vunpack.c.l.b16 %v237
      %v378 = vunpack.c.l.b16 %v238
      %v379 = vpack.c.b16 %v316, %v315
      %v380 = vpack.c.b16 %v318, %v317
      %v381 = vpack.c.b16 %v320, %v319
      %v382 = vpack.c.b16 %v322, %v321
      %v383 = vpack.c.b16 %v324, %v323
      %v384 = vpack.c.b16 %v326, %v325
      %v385 = vpack.c.b16 %v328, %v327
      %v386 = vpack.c.b16 %v330, %v329
      %v387 = vpack.c.b16 %v332, %v331
      %v388 = vpack.c.b16 %v334, %v333
      %v389 = vpack.c.b16 %v336, %v335
      %v390 = vpack.c.b16 %v338, %v337
      %v391 = vpack.c.b16 %v340, %v339
      %v392 = vpack.c.b16 %v342, %v341
      %v393 = vpack.c.b16 %v344, %v343
      %v394 = vpack.c.b16 %v346, %v345
      %v395 = vpack.c.b16 %v348, %v347
      %v396 = vpack.c.b16 %v350, %v349
      %v397 = vpack.c.b16 %v352, %v351
      %v398 = vpack.c.b16 %v354, %v353
      %v399 = vpack.c.b16 %v356, %v355
      %v400 = vpack.c.b16 %v358, %v357
      %v401 = vpack.c.b16 %v360, %v359
      %v402 = vpack.c.b16 %v362, %v361
      %v403 = vpack.c.b16 %v364, %v363
      %v404 = vpack.c.b16 %v366, %v365
      %v405 = vpack.c.b16 %v368, %v367
      %v406 = vpack.c.b16 %v370, %v369
      %v407 = vpack.c.b16 %v372, %v371
      %v408 = vpack.c.b16 %v374, %v373
      %v409 = vpack.c.b16 %v376, %v375
      %v410 = vpack.c.b16 %v378, %v377
      %v416 = vunpack.c.l.b16 %v239
      %v417 = vunpack.c.l.b16 %v240
      %v418 = vunpack.c.l.b16 %v241
      %v419 = vunpack.c.l.b16 %v242
      %v420 = vunpack.c.l.b16 %v243
      %v421 = vpack.c.b16 %v417, %v416
      %v422 = vpack.c.b16 %v419, %v418
      %v423 = vpack.c.b16 %v420, %v420
      %vm426 = vcmask 293888
      %v428 = vsel %vm426, %v379, 0
      %v431 = vsel %vm426, %v380, 0
      %v434 = vsel %vm426, %v381, 0
      %v437 = vsel %vm426, %v382, 0
      %v440 = vsel %vm426, %v383, 0
      %v443 = vsel %vm426, %v384, 0
      %v446 = vsel %vm426, %v385, 0
      %v449 = vsel %vm426, %v386, 0
      %v452 = vsel %vm426, %v387, 0
      %v455 = vsel %vm426, %v388, 0
      %v458 = vsel %vm426, %v389, 0
      %v461 = vsel %vm426, %v390, 0
      %v464 = vsel %vm426, %v391, 0
      %v467 = vsel %vm426, %v392, 0
      %v470 = vsel %vm426, %v393, 0
      %v473 = vsel %vm426, %v394, 0
      %v476 = vsel %vm426, %v395, 0
      %v479 = vsel %vm426, %v396, 0
      %v482 = vsel %vm426, %v397, 0
      %v485 = vsel %vm426, %v398, 0
      %v488 = vsel %vm426, %v399, 0
      %v491 = vsel %vm426, %v400, 0
      %v494 = vsel %vm426, %v401, 0
      %v497 = vsel %vm426, %v402, 0
      %v500 = vsel %vm426, %v403, 0
      %v503 = vsel %vm426, %v404, 0
      %v506 = vsel %vm426, %v405, 0
      %v509 = vsel %vm426, %v406, 0
      %v512 = vsel %vm426, %v407, 0
      %v515 = vsel %vm426, %v408, 0
      %v518 = vsel %vm426, %v409, 0
      %v521 = vsel %vm426, %v410, 0
      %vm523 = vcmask 1041408
      %v525 = vsel %vm523, %v423, 0
      %527 = vmatprep.subr.bf16.mxu0 0
      %528 = vmatpush1.bf16.msra.mxu0 %v421
      %529 = vmatprep.subr.bf16.mxu0 0
      %530 = vmatpush1.bf16.msra.mxu0 %v422
      %531 = vmatprep.subr.bf16.mxu0 0
      %532 = vmatpush1.bf16.msra.mxu0 %v525
      %533 = vmatprep.subr.bf16.mxu0 0
      %534 = vmatpush1.bf16.msra.mxu0 0
      %535 = vmatprep.subr.bf16.mxu0 0
      %536 = vmatpush1.bf16.msra.mxu0 0
      %537 = vmatprep.subr.bf16.mxu0 0
      %538 = vmatpush1.bf16.msra.mxu0 0
      %539 = vmatprep.subr.bf16.mxu0 0
      %540 = vmatpush1.bf16.msra.mxu0 0
      %541 = vmatprep.subr.bf16.mxu0 0
      %542 = vmatpush1.bf16.msra.mxu0 0
      %543 = vmatprep.subr.bf16.mxu0 0
      %544 = vmatpush1.bf16.msra.mxu0 0
      %545 = vmatprep.subr.bf16.mxu0 0
      %546 = vmatpush1.bf16.msra.mxu0 0
      %547 = vmatprep.subr.bf16.mxu0 0
      %548 = vmatpush1.bf16.msra.mxu0 0
      %549 = vmatprep.subr.bf16.mxu0 0
      %550 = vmatpush1.bf16.msra.mxu0 0
      %551 = vmatprep.subr.bf16.mxu0 0
      %552 = vmatpush1.bf16.msra.mxu0 0
      %553 = vmatprep.subr.bf16.mxu0 0
      %554 = vmatpush1.bf16.msra.mxu0 0
      %555 = vmatprep.subr.bf16.mxu0 0
      %556 = vmatpush1.bf16.msra.mxu0 0
      %557 = vmatprep.subr.bf16.mxu0 0
      %558 = vmatpush1.bf16.msra.mxu0 0
      %559 = vmatprep.mubr.bf16.mxu0 0
      %560 = vmatmul.mubr.bf16.gmra.mrb[0].mxu0 %v428
      %v561 = vpop.f32.mrb[0].mxu0
      %v562 = vadd.f32 %v249, %v561
      %v563 = vpop.f32.mrb[0].mxu0
      %v564 = vpop.f32.mrb[0].mxu0
      %v565 = vadd.f32 %v249, %v564
      %v566 = vpop.f32.mrb[0].mxu0
      %567 = vmatprep.mubr.bf16.mxu0 0
      %568 = vmatmul.mubr.bf16.gmra.mrb[0].mxu0 %v431
      %v569 = vpop.f32.mrb[0].mxu0
      %v570 = vadd.f32 %v249, %v569
      %v571 = vpop.f32.mrb[0].mxu0
      %v572 = vpop.f32.mrb[0].mxu0
      %v573 = vadd.f32 %v249, %v572
      %v574 = vpop.f32.mrb[0].mxu0
      %575 = vmatprep.mubr.bf16.mxu0 0
      %576 = vmatmul.mubr.bf16.gmra.mrb[0].mxu0 %v434
      %v577 = vpop.f32.mrb[0].mxu0
      %v578 = vadd.f32 %v249, %v577
      %v579 = vpop.f32.mrb[0].mxu0
      %v580 = vpop.f32.mrb[0].mxu0
      %v581 = vadd.f32 %v249, %v580
      %v582 = vpop.f32.mrb[0].mxu0
      %583 = vmatprep.mubr.bf16.mxu0 0
      %584 = vmatmul.mubr.bf16.gmra.mrb[0].mxu0 %v437
      %v585 = vpop.f32.mrb[0].mxu0
      %v586 = vadd.f32 %v249, %v585
      %v587 = vpop.f32.mrb[0].mxu0
      %v588 = vpop.f32.mrb[0].mxu0
      %v589 = vadd.f32 %v249, %v588
      %v590 = vpop.f32.mrb[0].mxu0
      %591 = vmatprep.mubr.bf16.mxu0 0
      %592 = vmatmul.mubr.bf16.gmra.mrb[0].mxu0 %v440
      %v593 = vpop.f32.mrb[0].mxu0
      %v594 = vadd.f32 %v249, %v593
      %v595 = vpop.f32.mrb[0].mxu0
      %v596 = vpop.f32.mrb[0].mxu0
      %v597 = vadd.f32 %v249, %v596
      %v598 = vpop.f32.mrb[0].mxu0
      %599 = vmatprep.mubr.bf16.mxu0 0
      %600 = vmatmul.mubr.bf16.gmra.mrb[0].mxu0 %v443
      %v601 = vpop.f32.mrb[0].mxu0
      %v602 = vadd.f32 %v249, %v601
      %v603 = vpop.f32.mrb[0].mxu0
      %v604 = vpop.f32.mrb[0].mxu0
      %v605 = vadd.f32 %v249, %v604
      %v606 = vpop.f32.mrb[0].mxu0
      %607 = vmatprep.mubr.bf16.mxu0 0
      %608 = vmatmul.mubr.bf16.gmra.mrb[0].mxu0 %v446
      %v609 = vpop.f32.mrb[0].mxu0
      %v610 = vadd.f32 %v249, %v609
      %v611 = vpop.f32.mrb[0].mxu0
      %v612 = vpop.f32.mrb[0].mxu0
      %v613 = vadd.f32 %v249, %v612
      %v614 = vpop.f32.mrb[0].mxu0
      %615 = vmatprep.mubr.bf16.mxu0 0
      %616 = vmatmul.mubr.bf16.gmra.mrb[0].mxu0 %v449
      %v617 = vpop.f32.mrb[0].mxu0
      %v618 = vadd.f32 %v249, %v617
      %v619 = vpop.f32.mrb[0].mxu0
      %v620 = vpop.f32.mrb[0].mxu0
      %v621 = vadd.f32 %v249, %v620
      %v622 = vpop.f32.mrb[0].mxu0
      %623 = vmatprep.mubr.bf16.mxu0 0
      %624 = vmatmul.mubr.bf16.gmra.mrb[0].mxu0 %v452
      %v625 = vpop.f32.mrb[0].mxu0
      %v626 = vadd.f32 %v249, %v625
      %v627 = vpop.f32.mrb[0].mxu0
      %v628 = vpop.f32.mrb[0].mxu0
      %v629 = vadd.f32 %v249, %v628
      %v630 = vpop.f32.mrb[0].mxu0
      %631 = vmatprep.mubr.bf16.mxu0 0
      %632 = vmatmul.mubr.bf16.gmra.mrb[0].mxu0 %v455
      %v633 = vpop.f32.mrb[0].mxu0
      %v634 = vadd.f32 %v249, %v633
      %v635 = vpop.f32.mrb[0].mxu0
      %v636 = vpop.f32.mrb[0].mxu0
      %v637 = vadd.f32 %v249, %v636
      %v638 = vpop.f32.mrb[0].mxu0
      %639 = vmatprep.mubr.bf16.mxu0 0
      %640 = vmatmul.mubr.bf16.gmra.mrb[0].mxu0 %v458
      %v641 = vpop.f32.mrb[0].mxu0
      %v642 = vadd.f32 %v249, %v641
      %v643 = vpop.f32.mrb[0].mxu0
      %v644 = vpop.f32.mrb[0].mxu0
      %v645 = vadd.f32 %v249, %v644
      %v646 = vpop.f32.mrb[0].mxu0
      %647 = vmatprep.mubr.bf16.mxu0 0
      %648 = vmatmul.mubr.bf16.gmra.mrb[0].mxu0 %v461
      %v649 = vpop.f32.mrb[0].mxu0
      %v650 = vadd.f32 %v249, %v649
      %v651 = vpop.f32.mrb[0].mxu0
      %v652 = vpop.f32.mrb[0].mxu0
      %v653 = vadd.f32 %v249, %v652
      %v654 = vpop.f32.mrb[0].mxu0
      %655 = vmatprep.mubr.bf16.mxu0 0
      %656 = vmatmul.mubr.bf16.gmra.mrb[0].mxu0 %v464
      %v657 = vpop.f32.mrb[0].mxu0
      %v658 = vadd.f32 %v249, %v657
      %v659 = vpop.f32.mrb[0].mxu0
      %v660 = vpop.f32.mrb[0].mxu0
      %v661 = vadd.f32 %v249, %v660
      %v662 = vpop.f32.mrb[0].mxu0
      %663 = vmatprep.mubr.bf16.mxu0 0
      %664 = vmatmul.mubr.bf16.gmra.mrb[0].mxu0 %v467
      %v665 = vpop.f32.mrb[0].mxu0
      %v666 = vadd.f32 %v249, %v665
      %v667 = vpop.f32.mrb[0].mxu0
      %v668 = vpop.f32.mrb[0].mxu0
      %v669 = vadd.f32 %v249, %v668
      %v670 = vpop.f32.mrb[0].mxu0
      %671 = vmatprep.mubr.bf16.mxu0 0
      %672 = vmatmul.mubr.bf16.gmra.mrb[0].mxu0 %v470
      %v673 = vpop.f32.mrb[0].mxu0
      %v674 = vadd.f32 %v249, %v673
      %v675 = vpop.f32.mrb[0].mxu0
      %v676 = vpop.f32.mrb[0].mxu0
      %v677 = vadd.f32 %v249, %v676
      %v678 = vpop.f32.mrb[0].mxu0
      %679 = vmatprep.mubr.bf16.mxu0 0
      %680 = vmatmul.mubr.bf16.gmra.mrb[0].mxu0 %v473
      %v681 = vpop.f32.mrb[0].mxu0
      %v682 = vadd.f32 %v249, %v681
      %v683 = vpop.f32.mrb[0].mxu0
      %v684 = vpop.f32.mrb[0].mxu0
      %v685 = vadd.f32 %v249, %v684
      %v686 = vpop.f32.mrb[0].mxu0
      %687 = vmatprep.mubr.bf16.mxu0 0
      %688 = vmatmul.mubr.bf16.gmra.mrb[0].mxu0 %v476
      %v689 = vpop.f32.mrb[0].mxu0
      %v690 = vadd.f32 %v249, %v689
      %v691 = vpop.f32.mrb[0].mxu0
      %v692 = vpop.f32.mrb[0].mxu0
      %v693 = vadd.f32 %v249, %v692
      %v694 = vpop.f32.mrb[0].mxu0
      %695 = vmatprep.mubr.bf16.mxu0 0
      %696 = vmatmul.mubr.bf16.gmra.mrb[0].mxu0 %v479
      %v697 = vpop.f32.mrb[0].mxu0
      %v698 = vadd.f32 %v249, %v697
      %v699 = vpop.f32.mrb[0].mxu0
      %v700 = vpop.f32.mrb[0].mxu0
      %v701 = vadd.f32 %v249, %v700
      %v702 = vpop.f32.mrb[0].mxu0
      %703 = vmatprep.mubr.bf16.mxu0 0
      %704 = vmatmul.mubr.bf16.gmra.mrb[0].mxu0 %v482
      %v705 = vpop.f32.mrb[0].mxu0
      %v706 = vadd.f32 %v249, %v705
      %v707 = vpop.f32.mrb[0].mxu0
      %v708 = vpop.f32.mrb[0].mxu0
      %v709 = vadd.f32 %v249, %v708
      %v710 = vpop.f32.mrb[0].mxu0
      %711 = vmatprep.mubr.bf16.mxu0 0
      %712 = vmatmul.mubr.bf16.gmra.mrb[0].mxu0 %v485
      %v713 = vpop.f32.mrb[0].mxu0
      %v714 = vadd.f32 %v249, %v713
      %v715 = vpop.f32.mrb[0].mxu0
      %v716 = vpop.f32.mrb[0].mxu0
      %v717 = vadd.f32 %v249, %v716
      %v718 = vpop.f32.mrb[0].mxu0
      %719 = vmatprep.mubr.bf16.mxu0 0
      %720 = vmatmul.mubr.bf16.gmra.mrb[0].mxu0 %v488
      %v721 = vpop.f32.mrb[0].mxu0
      %v722 = vadd.f32 %v249, %v721
      %v723 = vpop.f32.mrb[0].mxu0
      %v724 = vpop.f32.mrb[0].mxu0
      %v725 = vadd.f32 %v249, %v724
      %v726 = vpop.f32.mrb[0].mxu0
      %727 = vmatprep.mubr.bf16.mxu0 0
      %728 = vmatmul.mubr.bf16.gmra.mrb[0].mxu0 %v491
      %v729 = vpop.f32.mrb[0].mxu0
      %v730 = vadd.f32 %v249, %v729
      %v731 = vpop.f32.mrb[0].mxu0
      %v732 = vpop.f32.mrb[0].mxu0
      %v733 = vadd.f32 %v249, %v732
      %v734 = vpop.f32.mrb[0].mxu0
      %735 = vmatprep.mubr.bf16.mxu0 0
      %736 = vmatmul.mubr.bf16.gmra.mrb[0].mxu0 %v494
      %v737 = vpop.f32.mrb[0].mxu0
      %v738 = vadd.f32 %v249, %v737
      %v739 = vpop.f32.mrb[0].mxu0
      %v740 = vpop.f32.mrb[0].mxu0
      %v741 = vadd.f32 %v249, %v740
      %v742 = vpop.f32.mrb[0].mxu0
      %743 = vmatprep.mubr.bf16.mxu0 0
      %744 = vmatmul.mubr.bf16.gmra.mrb[0].mxu0 %v497
      %v745 = vpop.f32.mrb[0].mxu0
      %v746 = vadd.f32 %v249, %v745
      %v747 = vpop.f32.mrb[0].mxu0
      %v748 = vpop.f32.mrb[0].mxu0
      %v749 = vadd.f32 %v249, %v748
      %v750 = vpop.f32.mrb[0].mxu0
      %751 = vmatprep.mubr.bf16.mxu0 0
      %752 = vmatmul.mubr.bf16.gmra.mrb[0].mxu0 %v500
      %v753 = vpop.f32.mrb[0].mxu0
      %v754 = vadd.f32 %v249, %v753
      %v755 = vpop.f32.mrb[0].mxu0
      %v756 = vpop.f32.mrb[0].mxu0
      %v757 = vadd.f32 %v249, %v756
      %v758 = vpop.f32.mrb[0].mxu0
      %759 = vmatprep.mubr.bf16.mxu0 0
      %760 = vmatmul.mubr.bf16.gmra.mrb[0].mxu0 %v503
      %v761 = vpop.f32.mrb[0].mxu0
      %v762 = vadd.f32 %v249, %v761
      %v763 = vpop.f32.mrb[0].mxu0
      %v764 = vpop.f32.mrb[0].mxu0
      %v765 = vadd.f32 %v249, %v764
      %v766 = vpop.f32.mrb[0].mxu0
      %767 = vmatprep.mubr.bf16.mxu0 0
      %768 = vmatmul.mubr.bf16.gmra.mrb[0].mxu0 %v506
      %v769 = vpop.f32.mrb[0].mxu0
      %v770 = vadd.f32 %v249, %v769
      %v771 = vpop.f32.mrb[0].mxu0
      %v772 = vpop.f32.mrb[0].mxu0
      %v773 = vadd.f32 %v249, %v772
      %v774 = vpop.f32.mrb[0].mxu0
      %775 = vmatprep.mubr.bf16.mxu0 0
      %776 = vmatmul.mubr.bf16.gmra.mrb[0].mxu0 %v509
      %v777 = vpop.f32.mrb[0].mxu0
      %v778 = vadd.f32 %v249, %v777
      %v779 = vpop.f32.mrb[0].mxu0
      %v780 = vpop.f32.mrb[0].mxu0
      %v781 = vadd.f32 %v249, %v780
      %v782 = vpop.f32.mrb[0].mxu0
      %783 = vmatprep.mubr.bf16.mxu0 0
      %784 = vmatmul.mubr.bf16.gmra.mrb[0].mxu0 %v512
      %v785 = vpop.f32.mrb[0].mxu0
      %v786 = vadd.f32 %v249, %v785
      %v787 = vpop.f32.mrb[0].mxu0
      %v788 = vpop.f32.mrb[0].mxu0
      %v789 = vadd.f32 %v249, %v788
      %v790 = vpop.f32.mrb[0].mxu0
      %791 = vmatprep.mubr.bf16.mxu0 0
      %792 = vmatmul.mubr.bf16.gmra.mrb[0].mxu0 %v515
      %v793 = vpop.f32.mrb[0].mxu0
      %v794 = vadd.f32 %v249, %v793
      %v795 = vpop.f32.mrb[0].mxu0
      %v796 = vpop.f32.mrb[0].mxu0
      %v797 = vadd.f32 %v249, %v796
      %v798 = vpop.f32.mrb[0].mxu0
      %799 = vmatprep.mubr.bf16.mxu0 0
      %800 = vmatmul.mubr.bf16.gmra.mrb[0].mxu0 %v518
      %v801 = vpop.f32.mrb[0].mxu0
      %v802 = vadd.f32 %v249, %v801
      %v803 = vpop.f32.mrb[0].mxu0
      %v804 = vpop.f32.mrb[0].mxu0
      %v805 = vadd.f32 %v249, %v804
      %v806 = vpop.f32.mrb[0].mxu0
      %807 = vmatprep.mubr.bf16.mxu0 0
      %808 = vmatmul.mubr.bf16.gmra.mrb[0].mxu0 %v521
      %v809 = vpop.f32.mrb[0].mxu0
      %v810 = vadd.f32 %v249, %v809
      %v811 = vpop.f32.mrb[0].mxu0
      %v812 = vpop.f32.mrb[0].mxu0
      %v813 = vadd.f32 %v249, %v812
      %v814 = vpop.f32.mrb[0].mxu0
      %815 = vdwg.mxu0
      %v816 = vmax.f32 %v562, 0.0
      %v817 = vmax.f32 %v565, 0.0
      %v818 = vmax.f32 %v570, 0.0
      %v819 = vmax.f32 %v573, 0.0
      %v820 = vmax.f32 %v578, 0.0
      %v821 = vmax.f32 %v581, 0.0
      %v822 = vmax.f32 %v586, 0.0
      %v823 = vmax.f32 %v589, 0.0
      %v824 = vmax.f32 %v594, 0.0
      %v825 = vmax.f32 %v597, 0.0
      %v826 = vmax.f32 %v602, 0.0
      %v827 = vmax.f32 %v605, 0.0
      %v828 = vmax.f32 %v610, 0.0
      %v829 = vmax.f32 %v613, 0.0
      %v830 = vmax.f32 %v618, 0.0
      %v831 = vmax.f32 %v621, 0.0
      %v832 = vmax.f32 %v626, 0.0
      %v833 = vmax.f32 %v629, 0.0
      %v834 = vmax.f32 %v634, 0.0
      %v835 = vmax.f32 %v637, 0.0
      %v836 = vmax.f32 %v642, 0.0
      %v837 = vmax.f32 %v645, 0.0
      %v838 = vmax.f32 %v650, 0.0
      %v839 = vmax.f32 %v653, 0.0
      %v840 = vmax.f32 %v658, 0.0
      %v841 = vmax.f32 %v661, 0.0
      %v842 = vmax.f32 %v666, 0.0
      %v843 = vmax.f32 %v669, 0.0
      %v844 = vmax.f32 %v674, 0.0
      %v845 = vmax.f32 %v677, 0.0
      %v846 = vmax.f32 %v682, 0.0
      %v847 = vmax.f32 %v685, 0.0
      %v848 = vmax.f32 %v690, 0.0
      %v849 = vmax.f32 %v693, 0.0
      %v850 = vmax.f32 %v698, 0.0
      %v851 = vmax.f32 %v701, 0.0
      %v852 = vmax.f32 %v706, 0.0
      %v853 = vmax.f32 %v709, 0.0
      %v854 = vmax.f32 %v714, 0.0
      %v855 = vmax.f32 %v717, 0.0
      %v856 = vmax.f32 %v722, 0.0
      %v857 = vmax.f32 %v725, 0.0
      %v858 = vmax.f32 %v730, 0.0
      %v859 = vmax.f32 %v733, 0.0
      %v860 = vmax.f32 %v738, 0.0
      %v861 = vmax.f32 %v741, 0.0
      %v862 = vmax.f32 %v746, 0.0
      %v863 = vmax.f32 %v749, 0.0
      %v864 = vmax.f32 %v754, 0.0
      %v865 = vmax.f32 %v757, 0.0
      %v866 = vmax.f32 %v762, 0.0
      %v867 = vmax.f32 %v765, 0.0
      %v868 = vmax.f32 %v770, 0.0
      %v869 = vmax.f32 %v773, 0.0
      %v870 = vmax.f32 %v778, 0.0
      %v871 = vmax.f32 %v781, 0.0
      %v872 = vmax.f32 %v786, 0.0
      %v873 = vmax.f32 %v789, 0.0
      %v874 = vmax.f32 %v794, 0.0
      %v875 = vmax.f32 %v797, 0.0
      %v876 = vmax.f32 %v802, 0.0
      %v877 = vmax.f32 %v805, 0.0
      %v878 = vmax.f32 %v810, 0.0
      %v879 = vmax.f32 %v813, 0.0
      %880 = vst [vmem:[%s172] sm:$0xff] %v816
      %881 = vst [vmem:[%s172 + $0x8] sm:$0xff] %v817
      %882 = vst [vmem:[%s172 + $0x10] sm:$0xff] %v818
      %883 = vst [vmem:[%s172 + $0x18] sm:$0xff] %v819
      %884 = vst [vmem:[%s172 + $0x20] sm:$0xff] %v820
      %885 = vst [vmem:[%s172 + $0x28] sm:$0xff] %v821
      %886 = vst [vmem:[%s172 + $0x30] sm:$0xff] %v822
      %887 = vst [vmem:[%s172 + $0x38] sm:$0xff] %v823
      %888 = vst [vmem:[%s172 + $0x40] sm:$0xff] %v824
      %889 = vst [vmem:[%s172 + $0x48] sm:$0xff] %v825
      %890 = vst [vmem:[%s172 + $0x50] sm:$0xff] %v826
      %891 = vst [vmem:[%s172 + $0x58] sm:$0xff] %v827
      %892 = vst [vmem:[%s172 + $0x60] sm:$0xff] %v828
      %893 = vst [vmem:[%s172 + $0x68] sm:$0xff] %v829
      %894 = vst [vmem:[%s172 + $0x70] sm:$0xff] %v830
      %895 = vst [vmem:[%s172 + $0x78] sm:$0xff] %v831
      %896 = vst [vmem:[%s172 + $0x80] sm:$0xff] %v832
      %897 = vst [vmem:[%s172 + $0x88] sm:$0xff] %v833
      %898 = vst [vmem:[%s172 + $0x90] sm:$0xff] %v834
      %899 = vst [vmem:[%s172 + $0x98] sm:$0xff] %v835
      %900 = vst [vmem:[%s172 + $0xa0] sm:$0xff] %v836
      %901 = vst [vmem:[%s172 + $0xa8] sm:$0xff] %v837
      %902 = vst [vmem:[%s172 + $0xb0] sm:$0xff] %v838
      %903 = vst [vmem:[%s172 + $0xb8] sm:$0xff] %v839
      %904 = vst [vmem:[%s172 + $0xc0] sm:$0xff] %v840
      %905 = vst [vmem:[%s172 + $0xc8] sm:$0xff] %v841
      %906 = vst [vmem:[%s172 + $0xd0] sm:$0xff] %v842
      %907 = vst [vmem:[%s172 + $0xd8] sm:$0xff] %v843
      %908 = vst [vmem:[%s172 + $0xe0] sm:$0xff] %v844
      %909 = vst [vmem:[%s172 + $0xe8] sm:$0xff] %v845
      %910 = vst [vmem:[%s172 + $0xf0] sm:$0xff] %v846
      %911 = vst [vmem:[%s172 + $0xf8] sm:$0xff] %v847
      %912 = vst [vmem:[%s172 + $0x100] sm:$0xff] %v848
      %913 = vst [vmem:[%s172 + $0x108] sm:$0xff] %v849
      %914 = vst [vmem:[%s172 + $0x110] sm:$0xff] %v850
      %915 = vst [vmem:[%s172 + $0x118] sm:$0xff] %v851
      %916 = vst [vmem:[%s172 + $0x120] sm:$0xff] %v852
      %917 = vst [vmem:[%s172 + $0x128] sm:$0xff] %v853
      %918 = vst [vmem:[%s172 + $0x130] sm:$0xff] %v854
      %919 = vst [vmem:[%s172 + $0x138] sm:$0xff] %v855
      %920 = vst [vmem:[%s172 + $0x140] sm:$0xff] %v856
      %921 = vst [vmem:[%s172 + $0x148] sm:$0xff] %v857
      %922 = vst [vmem:[%s172 + $0x150] sm:$0xff] %v858
      %923 = vst [vmem:[%s172 + $0x158] sm:$0xff] %v859
      %924 = vst [vmem:[%s172 + $0x160] sm:$0xff] %v860
      %925 = vst [vmem:[%s172 + $0x168] sm:$0xff] %v861
      %926 = vst [vmem:[%s172 + $0x170] sm:$0xff] %v862
      %927 = vst [vmem:[%s172 + $0x178] sm:$0xff] %v863
      %928 = vst [vmem:[%s172 + $0x180] sm:$0xff] %v864
      %929 = vst [vmem:[%s172 + $0x188] sm:$0xff] %v865
      %930 = vst [vmem:[%s172 + $0x190] sm:$0xff] %v866
      %931 = vst [vmem:[%s172 + $0x198] sm:$0xff] %v867
      %932 = vst [vmem:[%s172 + $0x1a0] sm:$0xff] %v868
      %933 = vst [vmem:[%s172 + $0x1a8] sm:$0xff] %v869
      %934 = vst [vmem:[%s172 + $0x1b0] sm:$0xff] %v870
      %935 = vst [vmem:[%s172 + $0x1b8] sm:$0xff] %v871
      %936 = vst [vmem:[%s172 + $0x1c0] sm:$0xff] %v872
      %937 = vst [vmem:[%s172 + $0x1c8] sm:$0xff] %v873
      %938 = vst [vmem:[%s172 + $0x1d0] sm:$0xff] %v874
      %939 = vst [vmem:[%s172 + $0x1d8] sm:$0xff] %v875
      %940 = vst [vmem:[%s172 + $0x1e0] sm:$0xff] %v876
      %941 = vst [vmem:[%s172 + $0x1e8] sm:$0xff] %v877
      %942 = vst [vmem:[%s172 + $0x1f0] sm:$0xff] %v878
      %943 = vst [vmem:[%s172 + $0x1f8] sm:$0xff] %v879
      %s944 = smul.u32 64, %s14
      %p945 = scmp.lt.s32.totalorder %s944, 127
      %s946 = scalar_select %p945, %s944, 127
      %s947 = smul.addr %s946, 8
      %s948 = scalar_lea.vmem %s3, %s947
      // Predicated region
      $region33: #{decoder_forward.3} parent=31 // pred_check
        %p949 = pneg %p100
      $region34: #{decoder_forward.3} parent=31 // pred_check_branch
        %951 = sbr.rel (%p949) target = $region36
      $region35: #{decoder_forward.3} parent=31 // pred_region
        %s952 = smul.u32 64, %s14
      $region36: #{decoder_forward.3} parent=31 // pred_fallthru
        _
    $region32: #{decoder_forward.3} parent=5 // pred_fallthru
      _
    %p953 = scmp.le.s32.totalorder 2, %s9
    // Predicated region
    $region37: #{decoder_forward.3} parent=5 // pred_check
      %p954 = pneg %p953
    $region38: #{decoder_forward.3} parent=5 // pred_check_branch
      %956 = sbr.rel (%p954) target = $region40
    $region39: #{decoder_forward.3} parent=5 // pred_region
      %s957 = ssub.s32 %s9, 2
      // Predicated region
      $region41: #{decoder_forward.3} parent=39 // pred_check
        %p958 = pneg %p106
      $region42: #{decoder_forward.3} parent=39 // pred_check_branch
        %960 = sbr.rel (%p958) target = $region44
      $region43: #{decoder_forward.3} parent=39 // pred_region
        %s961 = smul.u32 64, %s15
        %p962 = scmp.lt.s32.totalorder %s961, 127
        %s963 = scalar_select %p962, %s961, 127
        %s964 = smul.addr %s963, 8
        %s965 = scalar_lea.vmem %s3, %s964
      $region44: #{decoder_forward.3} parent=39 // pred_fallthru
        _
    $region40: #{decoder_forward.3} parent=5 // pred_fallthru
      _
  $region6: #{decoder_forward.3} parent=0 // loop_footer
    %s13 = sadd.s32 1, %s9
  $region7: #{decoder_forward.3} parent=0 // loop_footer_branch
    %8 = sbr.rel target = $region3
  $region8: #{decoder_forward.3} parent=0 // loop_exit
    _

// kernel: decoder_forward.2
$region0: #{decoder_forward.2}
  #allocation0 [shape = 'u32[]', space=smem, size = 0x4, offset = 0x4, fixed_abs, tag = 'smem constant byte address 0x4 - core index']
  #allocation1 [shape = 'u32[144,128]{1,0:T(1,128)}', space=vmem, size = 0x12000, scoped, tag = 'internal scratch']
  %s0 = inlined_call_operand.vmem [shape: bf16[1024,36], index: 0, kind: input, shape index: {}]
  %s1 = inlined_call_operand.vmem [shape: bf16[36,128], index: 1, kind: input, shape index: {}]
  %s2 = inlined_call_operand.vmem [shape: f32[1,128], index: 2, kind: output, shape index: {0}]
  %s3 = inlined_call_operand.vmem [shape: f32[1,128], index: 3, kind: output, shape index: {1}]
  %4 = xla_tuple %s2, %s3
  %s5 = sld [smem:[#allocation0]]
  $region53: #{decoder_forward.2} parent=0
    _
  %s7 = ssub.s32 1, %s5
  %s8 = scalar_select 0, %s7, %s5
  loop: start=0, step=1, limit=4
  $region2: #{decoder_forward.2} parent=0 // loop_pre_header
    _
  $region3: #{decoder_forward.2} parent=0 // loop_header
    %s10 = sphi 0, %s14
    %p11 = scmp.ge.s32.totalorder %s10, 4
    %s20 = sphi 0, %s22
    %s23 = sphi 0, %s20
    %s24 = sphi 0, %s23
    %s40 = sphi 0, %s24
    %s44 = sphi 0, %s44
    %s46 = sphi 0, %s44
    %s47 = sphi 0, %s46
    %s61 = sphi 0, %s47
    %s65 = sphi 0, %s65
    %s67 = sphi 0, %s65
    %s68 = sphi 0, %s67
    %s82 = sphi 0, %s68
    %s86 = sphi 0, %s86
    %s88 = sphi 0, %s86
    %s89 = sphi 0, %s88
    %s103 = sphi 0, %s89
  $region4: #{decoder_forward.2} parent=0 // loop_header_branch
    %13 = sbr.rel (%p11) target = $region8
  $region5: #{decoder_forward.2} parent=0 // loop_body
    %s15 = ssub.s32 %s10, 1
    %s16 = ssub.s32 %s10, 2
    %s17 = sadd.s32 %s10, 1
    %s18 = ssub.s32 %s10, %s17
    %p19 = scmp.eq.s32.totalorder %s18, 0
    %s21 = sadd.s32 %s20, 1
    %s22 = scalar_select %p19, %s20, %s21
    %p25 = pneg %p19
    %p26 = scmp.eq.s32.totalorder %s10, 1
    %p27 = por %p25, %p26
    %p28 = scmp.ne.s32.totalorder %s20, %s23
    %p29 = scmp.eq.s32.totalorder %s10, 0
    %p30 = por %p28, %p29
    %p31 = scmp.ne.s32.totalorder %s20, %s23
    %p32 = scmp.eq.s32.totalorder %s15, 1
    %p33 = por %p31, %p32
    %p34 = scmp.ne.s32.totalorder %s23, %s24
    %p35 = scmp.eq.s32.totalorder %s15, 0
    %p36 = por %p34, %p35
    %p37 = scmp.ne.s32.totalorder %s23, %s24
    %p38 = scmp.eq.s32.totalorder %s16, 1
    %p39 = por %p37, %p38
    %p41 = scmp.ne.s32.totalorder %s24, %s40
    %p42 = scmp.eq.s32.totalorder %s16, 0
    %p43 = por %p41, %p42
    %s45 = sadd.s32 %s44, 1
    %p48 = scmp.eq.s32.totalorder %s10, 1
    %p49 = scmp.ne.s32.totalorder %s44, %s46
    %p50 = scmp.eq.s32.totalorder %s10, 0
    %p51 = por %p49, %p50
    %p52 = scmp.ne.s32.totalorder %s44, %s46
    %p53 = scmp.eq.s32.totalorder %s15, 1
    %p54 = por %p52, %p53
    %p55 = scmp.ne.s32.totalorder %s46, %s47
    %p56 = scmp.eq.s32.totalorder %s15, 0
    %p57 = por %p55, %p56
    %p58 = scmp.ne.s32.totalorder %s46, %s47
    %p59 = scmp.eq.s32.totalorder %s16, 1
    %p60 = por %p58, %p59
    %p62 = scmp.ne.s32.totalorder %s47, %s61
    %p63 = scmp.eq.s32.totalorder %s16, 0
    %p64 = por %p62, %p63
    %s66 = sadd.s32 %s65, 1
    %p69 = scmp.eq.s32.totalorder %s10, 1
    %p70 = scmp.ne.s32.totalorder %s65, %s67
    %p71 = scmp.eq.s32.totalorder %s10, 0
    %p72 = por %p70, %p71
    %p73 = scmp.ne.s32.totalorder %s65, %s67
    %p74 = scmp.eq.s32.totalorder %s15, 1
    %p75 = por %p73, %p74
    %p76 = scmp.ne.s32.totalorder %s67, %s68
    %p77 = scmp.eq.s32.totalorder %s15, 0
    %p78 = por %p76, %p77
    %p79 = scmp.ne.s32.totalorder %s67, %s68
    %p80 = scmp.eq.s32.totalorder %s16, 1
    %p81 = por %p79, %p80
    %p83 = scmp.ne.s32.totalorder %s68, %s82
    %p84 = scmp.eq.s32.totalorder %s16, 0
    %p85 = por %p83, %p84
    %s87 = sadd.s32 %s86, 1
    %p90 = scmp.eq.s32.totalorder %s10, 1
    %p91 = scmp.ne.s32.totalorder %s86, %s88
    %p92 = scmp.eq.s32.totalorder %s10, 0
    %p93 = por %p91, %p92
    %p94 = scmp.ne.s32.totalorder %s86, %s88
    %p95 = scmp.eq.s32.totalorder %s15, 1
    %p96 = por %p94, %p95
    %p97 = scmp.ne.s32.totalorder %s88, %s89
    %p98 = scmp.eq.s32.totalorder %s15, 0
    %p99 = por %p97, %p98
    %p100 = scmp.ne.s32.totalorder %s88, %s89
    %p101 = scmp.eq.s32.totalorder %s16, 1
    %p102 = por %p100, %p101
    %p104 = scmp.ne.s32.totalorder %s89, %s103
    %p105 = scmp.eq.s32.totalorder %s16, 0
    %p106 = por %p104, %p105
    %p107 = scmp.le.s32.totalorder 1, %s10
    %p108 = scmp.lt.s32.totalorder %s10, 3
    %p109 = pnand %p107, %p108
    %p110 = pneg %p109
    // Predicated region
    $region9: #{decoder_forward.2} parent=5 // pred_check
      _
    $region10: #{decoder_forward.2} parent=5 // pred_check_branch
      %112 = sbr.rel (%p109) target = $region12
    $region11: #{decoder_forward.2} parent=5 // pred_region
      %s113 = ssub.s32 %s10, 1
      // Predicated region
      $region13: #{decoder_forward.2} parent=11 // pred_check
        %p114 = pneg %p57
      $region14: #{decoder_forward.2} parent=11 // pred_check_branch
        %116 = sbr.rel (%p114) target = $region16
      $region15: #{decoder_forward.2} parent=11 // pred_region
        _
      $region16: #{decoder_forward.2} parent=11 // pred_fallthru
        _
    $region12: #{decoder_forward.2} parent=5 // pred_fallthru
      _
    %p117 = scmp.lt.s32.totalorder %s10, 2
    // Predicated region
    $region17: #{decoder_forward.2} parent=5 // pred_check
      %p118 = pneg %p117
    $region18: #{decoder_forward.2} parent=5 // pred_check_branch
      %120 = sbr.rel (%p118) target = $region20
    $region19: #{decoder_forward.2} parent=5 // pred_region
      // Predicated region
      $region21: #{decoder_forward.2} parent=19 // pred_check
        %p121 = pneg %p30
      $region22: #{decoder_forward.2} parent=19 // pred_check_branch
        %123 = sbr.rel (%p121) target = $region24
      $region23: #{decoder_forward.2} parent=19 // pred_region
        %s124 = smul.u32 64, %s10
        %p125 = scmp.lt.s32.totalorder %s124, 127
        %s126 = scalar_select %p125, %s124, 127
        %s127 = smul.addr %s126, 4
        %s128 = scalar_lea.vmem %s0, %s127
        %s129 = smul.u32 64, %s10
      $region24: #{decoder_forward.2} parent=19 // pred_fallthru
        _
    $region20: #{decoder_forward.2} parent=5 // pred_fallthru
      _
    %p130 = scmp.le.s32.totalorder 1, %s10
    %p131 = scmp.lt.s32.totalorder %s10, 3
    %p132 = pnand %p130, %p131
    %p133 = pneg %p132
    // Predicated region
    $region25: #{decoder_forward.2} parent=5 // pred_check
      _
    $region26: #{decoder_forward.2} parent=5 // pred_check_branch
      %135 = sbr.rel (%p132) target = $region28
    $region27: #{decoder_forward.2} parent=5 // pred_region
      %s136 = ssub.s32 %s10, 1
      %s137 = smul.u32 64, %s15
      %p138 = scmp.lt.s32.totalorder %s137, 127
      %s139 = scalar_select %p138, %s137, 127
      %s140 = smul.addr %s139, 4
      %s141 = scalar_lea.vmem %s0, %s140
      %p142 = pneg %p36
      %p143 = pneg %p33
      %p144 = pneg %p57
      %p145 = pneg %p54
      %p146 = pneg %p78
      %p147 = pneg %p75
      %p148 = pneg %p99
      %p149 = pneg %p96
      %s150 = smul.u32 64, %s15
      %p151 = scmp.lt.s32.totalorder %s150, 127
      %s152 = scalar_select %p151, %s150, 127
      %s153 = smul.addr %s152, 4
      %s154 = scalar_lea.vmem %s0, %s153
      %s155 = smul.u32 64, %s15
      %v157 = vld [vmem:[%s154] sm:$0xf]
      %v158 = vld [vmem:[%s154 + $0x4] sm:$0xf]
      %v159 = vld [vmem:[%s154 + $0x8] sm:$0xf]
      %v160 = vld [vmem:[%s154 + $0xc] sm:$0xf]
      %v161 = vld [vmem:[%s154 + $0x10] sm:$0xf]
      %v162 = vld [vmem:[%s154 + $0x14] sm:$0xf]
      %v163 = vld [vmem:[%s154 + $0x18] sm:$0xf]
      %v164 = vld [vmem:[%s154 + $0x1c] sm:$0xf]
      %v165 = vld [vmem:[%s154 + $0x20] sm:$0xf]
      %v166 = vld [vmem:[%s154 + $0x24] sm:$0xf]
      %v167 = vld [vmem:[%s154 + $0x28] sm:$0xf]
      %v168 = vld [vmem:[%s154 + $0x2c] sm:$0xf]
      %v169 = vld [vmem:[%s154 + $0x30] sm:$0xf]
      %v170 = vld [vmem:[%s154 + $0x34] sm:$0xf]
      %v171 = vld [vmem:[%s154 + $0x38] sm:$0xf]
      %v172 = vld [vmem:[%s154 + $0x3c] sm:$0xf]
      %v173 = vld [vmem:[%s154 + $0x40] sm:$0xf]
      %v174 = vld [vmem:[%s154 + $0x44] sm:$0xf]
      %v175 = vld [vmem:[%s154 + $0x48] sm:$0xf]
      %v176 = vld [vmem:[%s154 + $0x4c] sm:$0xf]
      %v177 = vld [vmem:[%s154 + $0x50] sm:$0xf]
      %v178 = vld [vmem:[%s154 + $0x54] sm:$0xf]
      %v179 = vld [vmem:[%s154 + $0x58] sm:$0xf]
      %v180 = vld [vmem:[%s154 + $0x5c] sm:$0xf]
      %v181 = vld [vmem:[%s154 + $0x60] sm:$0xf]
      %v182 = vld [vmem:[%s154 + $0x64] sm:$0xf]
      %v183 = vld [vmem:[%s154 + $0x68] sm:$0xf]
      %v184 = vld [vmem:[%s154 + $0x6c] sm:$0xf]
      %v185 = vld [vmem:[%s154 + $0x70] sm:$0xf]
      %v186 = vld [vmem:[%s154 + $0x74] sm:$0xf]
      %v187 = vld [vmem:[%s154 + $0x78] sm:$0xf]
      %v188 = vld [vmem:[%s154 + $0x7c] sm:$0xf]
      %v189 = vld [vmem:[%s154 + $0x80] sm:$0xf]
      %v190 = vld [vmem:[%s154 + $0x84] sm:$0xf]
      %v191 = vld [vmem:[%s154 + $0x88] sm:$0xf]
      %v192 = vld [vmem:[%s154 + $0x8c] sm:$0xf]
      %v193 = vld [vmem:[%s154 + $0x90] sm:$0xf]
      %v194 = vld [vmem:[%s154 + $0x94] sm:$0xf]
      %v195 = vld [vmem:[%s154 + $0x98] sm:$0xf]
      %v196 = vld [vmem:[%s154 + $0x9c] sm:$0xf]
      %v197 = vld [vmem:[%s154 + $0xa0] sm:$0xf]
      %v198 = vld [vmem:[%s154 + $0xa4] sm:$0xf]
      %v199 = vld [vmem:[%s154 + $0xa8] sm:$0xf]
      %v200 = vld [vmem:[%s154 + $0xac] sm:$0xf]
      %v201 = vld [vmem:[%s154 + $0xb0] sm:$0xf]
      %v202 = vld [vmem:[%s154 + $0xb4] sm:$0xf]
      %v203 = vld [vmem:[%s154 + $0xb8] sm:$0xf]
      %v204 = vld [vmem:[%s154 + $0xbc] sm:$0xf]
      %v205 = vld [vmem:[%s154 + $0xc0] sm:$0xf]
      %v206 = vld [vmem:[%s154 + $0xc4] sm:$0xf]
      %v207 = vld [vmem:[%s154 + $0xc8] sm:$0xf]
      %v208 = vld [vmem:[%s154 + $0xcc] sm:$0xf]
      %v209 = vld [vmem:[%s154 + $0xd0] sm:$0xf]
      %v210 = vld [vmem:[%s154 + $0xd4] sm:$0xf]
      %v211 = vld [vmem:[%s154 + $0xd8] sm:$0xf]
      %v212 = vld [vmem:[%s154 + $0xdc] sm:$0xf]
      %v213 = vld [vmem:[%s154 + $0xe0] sm:$0xf]
      %v214 = vld [vmem:[%s154 + $0xe4] sm:$0xf]
      %v215 = vld [vmem:[%s154 + $0xe8] sm:$0xf]
      %v216 = vld [vmem:[%s154 + $0xec] sm:$0xf]
      %v217 = vld [vmem:[%s154 + $0xf0] sm:$0xf]
      %v218 = vld [vmem:[%s154 + $0xf4] sm:$0xf]
      %v219 = vld [vmem:[%s154 + $0xf8] sm:$0xf]
      %v220 = vld [vmem:[%s154 + $0xfc] sm:$0xf]
      %v221 = vld [vmem:[%s1] sm:$0xf]
      %v222 = vld [vmem:[%s1 + $0x4] sm:$0xf]
      %v223 = vld [vmem:[%s1 + $0x8] sm:$0xf]
      %v224 = vld [vmem:[%s1 + $0xc] sm:$0xf]
      %v225 = vld [vmem:[%s1 + $0x10] sm:$0x3]
      %v290 = vunpack.c.l.b16 %v157
      %v291 = vunpack.c.l.b16 %v158
      %v292 = vunpack.c.l.b16 %v159
      %v293 = vunpack.c.l.b16 %v160
      %v294 = vunpack.c.l.b16 %v161
      %v295 = vunpack.c.l.b16 %v162
      %v296 = vunpack.c.l.b16 %v163
      %v297 = vunpack.c.l.b16 %v164
      %v298 = vunpack.c.l.b16 %v165
      %v299 = vunpack.c.l.b16 %v166
      %v300 = vunpack.c.l.b16 %v167
      %v301 = vunpack.c.l.b16 %v168
      %v302 = vunpack.c.l.b16 %v169
      %v303 = vunpack.c.l.b16 %v170
      %v304 = vunpack.c.l.b16 %v171
      %v305 = vunpack.c.l.b16 %v172
      %v306 = vunpack.c.l.b16 %v173
      %v307 = vunpack.c.l.b16 %v174
      %v308 = vunpack.c.l.b16 %v175
      %v309 = vunpack.c.l.b16 %v176
      %v310 = vunpack.c.l.b16 %v177
      %v311 = vunpack.c.l.b16 %v178
      %v312 = vunpack.c.l.b16 %v179
      %v313 = vunpack.c.l.b16 %v180
      %v314 = vunpack.c.l.b16 %v181
      %v315 = vunpack.c.l.b16 %v182
      %v316 = vunpack.c.l.b16 %v183
      %v317 = vunpack.c.l.b16 %v184
      %v318 = vunpack.c.l.b16 %v185
      %v319 = vunpack.c.l.b16 %v186
      %v320 = vunpack.c.l.b16 %v187
      %v321 = vunpack.c.l.b16 %v188
      %v322 = vunpack.c.l.b16 %v189
      %v323 = vunpack.c.l.b16 %v190
      %v324 = vunpack.c.l.b16 %v191
      %v325 = vunpack.c.l.b16 %v192
      %v326 = vunpack.c.l.b16 %v193
      %v327 = vunpack.c.l.b16 %v194
      %v328 = vunpack.c.l.b16 %v195
      %v329 = vunpack.c.l.b16 %v196
      %v330 = vunpack.c.l.b16 %v197
      %v331 = vunpack.c.l.b16 %v198
      %v332 = vunpack.c.l.b16 %v199
      %v333 = vunpack.c.l.b16 %v200
      %v334 = vunpack.c.l.b16 %v201
      %v335 = vunpack.c.l.b16 %v202
      %v336 = vunpack.c.l.b16 %v203
      %v337 = vunpack.c.l.b16 %v204
      %v338 = vunpack.c.l.b16 %v205
      %v339 = vunpack.c.l.b16 %v206
      %v340 = vunpack.c.l.b16 %v207
      %v341 = vunpack.c.l.b16 %v208
      %v342 = vunpack.c.l.b16 %v209
      %v343 = vunpack.c.l.b16 %v210
      %v344 = vunpack.c.l.b16 %v211
      %v345 = vunpack.c.l.b16 %v212
      %v346 = vunpack.c.l.b16 %v213
      %v347 = vunpack.c.l.b16 %v214
      %v348 = vunpack.c.l.b16 %v215
      %v349 = vunpack.c.l.b16 %v216
      %v350 = vunpack.c.l.b16 %v217
      %v351 = vunpack.c.l.b16 %v218
      %v352 = vunpack.c.l.b16 %v219
      %v353 = vunpack.c.l.b16 %v220
      %v354 = vpack.c.b16 %v291, %v290
      %v355 = vpack.c.b16 %v293, %v292
      %v356 = vpack.c.b16 %v295, %v294
      %v357 = vpack.c.b16 %v297, %v296
      %v358 = vpack.c.b16 %v299, %v298
      %v359 = vpack.c.b16 %v301, %v300
      %v360 = vpack.c.b16 %v303, %v302
      %v361 = vpack.c.b16 %v305, %v304
      %v362 = vpack.c.b16 %v307, %v306
      %v363 = vpack.c.b16 %v309, %v308
      %v364 = vpack.c.b16 %v311, %v310
      %v365 = vpack.c.b16 %v313, %v312
      %v366 = vpack.c.b16 %v315, %v314
      %v367 = vpack.c.b16 %v317, %v316
      %v368 = vpack.c.b16 %v319, %v318
      %v369 = vpack.c.b16 %v321, %v320
      %v370 = vpack.c.b16 %v323, %v322
      %v371 = vpack.c.b16 %v325, %v324
      %v372 = vpack.c.b16 %v327, %v326
      %v373 = vpack.c.b16 %v329, %v328
      %v374 = vpack.c.b16 %v331, %v330
      %v375 = vpack.c.b16 %v333, %v332
      %v376 = vpack.c.b16 %v335, %v334
      %v377 = vpack.c.b16 %v337, %v336
      %v378 = vpack.c.b16 %v339, %v338
      %v379 = vpack.c.b16 %v341, %v340
      %v380 = vpack.c.b16 %v343, %v342
      %v381 = vpack.c.b16 %v345, %v344
      %v382 = vpack.c.b16 %v347, %v346
      %v383 = vpack.c.b16 %v349, %v348
      %v384 = vpack.c.b16 %v351, %v350
      %v385 = vpack.c.b16 %v353, %v352
      %v391 = vunpack.c.l.b16 %v221
      %v392 = vunpack.c.l.b16 %v222
      %v393 = vunpack.c.l.b16 %v223
      %v394 = vunpack.c.l.b16 %v224
      %v395 = vunpack.c.l.b16 %v225
      %v396 = vpack.c.b16 %v392, %v391
      %v397 = vpack.c.b16 %v394, %v393
      %v398 = vpack.c.b16 %v395, %v395
      %vm401 = vcmask 293888
      %v403 = vsel %vm401, %v354, 0
      %v406 = vsel %vm401, %v355, 0
      %v409 = vsel %vm401, %v356, 0
      %v412 = vsel %vm401, %v357, 0
      %v415 = vsel %vm401, %v358, 0
      %v418 = vsel %vm401, %v359, 0
      %v421 = vsel %vm401, %v360, 0
      %v424 = vsel %vm401, %v361, 0
      %v427 = vsel %vm401, %v362, 0
      %v430 = vsel %vm401, %v363, 0
      %v433 = vsel %vm401, %v364, 0
      %v436 = vsel %vm401, %v365, 0
      %v439 = vsel %vm401, %v366, 0
      %v442 = vsel %vm401, %v367, 0
      %v445 = vsel %vm401, %v368, 0
      %v448 = vsel %vm401, %v369, 0
      %v451 = vsel %vm401, %v370, 0
      %v454 = vsel %vm401, %v371, 0
      %v457 = vsel %vm401, %v372, 0
      %v460 = vsel %vm401, %v373, 0
      %v463 = vsel %vm401, %v374, 0
      %v466 = vsel %vm401, %v375, 0
      %v469 = vsel %vm401, %v376, 0
      %v472 = vsel %vm401, %v377, 0
      %v475 = vsel %vm401, %v378, 0
      %v478 = vsel %vm401, %v379, 0
      %v481 = vsel %vm401, %v380, 0
      %v484 = vsel %vm401, %v381, 0
      %v487 = vsel %vm401, %v382, 0
      %v490 = vsel %vm401, %v383, 0
      %v493 = vsel %vm401, %v384, 0
      %v496 = vsel %vm401, %v385, 0
      %vm498 = vcmask 1041408
      %v500 = vsel %vm498, %v398, 0
      %502 = vmatprep.subr.bf16.mxu0 0
      %503 = vmatpush1.bf16.msra.mxu0 %v396
      %504 = vmatprep.subr.bf16.mxu0 0
      %505 = vmatpush1.bf16.msra.mxu0 %v397
      %506 = vmatprep.subr.bf16.mxu0 0
      %507 = vmatpush1.bf16.msra.mxu0 %v500
      %508 = vmatprep.subr.bf16.mxu0 0
      %509 = vmatpush1.bf16.msra.mxu0 0
      %510 = vmatprep.subr.bf16.mxu0 0
      %511 = vmatpush1.bf16.msra.mxu0 0
      %512 = vmatprep.subr.bf16.mxu0 0
      %513 = vmatpush1.bf16.msra.mxu0 0
      %514 = vmatprep.subr.bf16.mxu0 0
      %515 = vmatpush1.bf16.msra.mxu0 0
      %516 = vmatprep.subr.bf16.mxu0 0
      %517 = vmatpush1.bf16.msra.mxu0 0
      %518 = vmatprep.subr.bf16.mxu0 0
      %519 = vmatpush1.bf16.msra.mxu0 0
      %520 = vmatprep.subr.bf16.mxu0 0
      %521 = vmatpush1.bf16.msra.mxu0 0
      %522 = vmatprep.subr.bf16.mxu0 0
      %523 = vmatpush1.bf16.msra.mxu0 0
      %524 = vmatprep.subr.bf16.mxu0 0
      %525 = vmatpush1.bf16.msra.mxu0 0
      %526 = vmatprep.subr.bf16.mxu0 0
      %527 = vmatpush1.bf16.msra.mxu0 0
      %528 = vmatprep.subr.bf16.mxu0 0
      %529 = vmatpush1.bf16.msra.mxu0 0
      %530 = vmatprep.subr.bf16.mxu0 0
      %531 = vmatpush1.bf16.msra.mxu0 0
      %532 = vmatprep.subr.bf16.mxu0 0
      %533 = vmatpush1.bf16.msra.mxu0 0
      %534 = vmatprep.mubr.bf16.mxu0 0
      %535 = vmatmul.mubr.bf16.gmra.mrb[0].mxu0 %v403
      %v536 = vpop.f32.mrb[0].mxu0
      %v537 = vadd.f32 0.0, %v536
      %v538 = vpop.f32.mrb[0].mxu0
      %v539 = vpop.f32.mrb[0].mxu0
      %v540 = vadd.f32 0.0, %v539
      %v541 = vpop.f32.mrb[0].mxu0
      %542 = vmatprep.mubr.bf16.mxu0 0
      %543 = vmatmul.mubr.bf16.gmra.mrb[0].mxu0 %v406
      %v544 = vpop.f32.mrb[0].mxu0
      %v545 = vadd.f32 0.0, %v544
      %v546 = vpop.f32.mrb[0].mxu0
      %v547 = vpop.f32.mrb[0].mxu0
      %v548 = vadd.f32 0.0, %v547
      %v549 = vpop.f32.mrb[0].mxu0
      %550 = vmatprep.mubr.bf16.mxu0 0
      %551 = vmatmul.mubr.bf16.gmra.mrb[0].mxu0 %v409
      %v552 = vpop.f32.mrb[0].mxu0
      %v553 = vadd.f32 0.0, %v552
      %v554 = vpop.f32.mrb[0].mxu0
      %v555 = vpop.f32.mrb[0].mxu0
      %v556 = vadd.f32 0.0, %v555
      %v557 = vpop.f32.mrb[0].mxu0
      %558 = vmatprep.mubr.bf16.mxu0 0
      %559 = vmatmul.mubr.bf16.gmra.mrb[0].mxu0 %v412
      %v560 = vpop.f32.mrb[0].mxu0
      %v561 = vadd.f32 0.0, %v560
      %v562 = vpop.f32.mrb[0].mxu0
      %v563 = vpop.f32.mrb[0].mxu0
      %v564 = vadd.f32 0.0, %v563
      %v565 = vpop.f32.mrb[0].mxu0
      %566 = vmatprep.mubr.bf16.mxu0 0
      %567 = vmatmul.mubr.bf16.gmra.mrb[0].mxu0 %v415
      %v568 = vpop.f32.mrb[0].mxu0
      %v569 = vadd.f32 0.0, %v568
      %v570 = vpop.f32.mrb[0].mxu0
      %v571 = vpop.f32.mrb[0].mxu0
      %v572 = vadd.f32 0.0, %v571
      %v573 = vpop.f32.mrb[0].mxu0
      %574 = vmatprep.mubr.bf16.mxu0 0
      %575 = vmatmul.mubr.bf16.gmra.mrb[0].mxu0 %v418
      %v576 = vpop.f32.mrb[0].mxu0
      %v577 = vadd.f32 0.0, %v576
      %v578 = vpop.f32.mrb[0].mxu0
      %v579 = vpop.f32.mrb[0].mxu0
      %v580 = vadd.f32 0.0, %v579
      %v581 = vpop.f32.mrb[0].mxu0
      %582 = vmatprep.mubr.bf16.mxu0 0
      %583 = vmatmul.mubr.bf16.gmra.mrb[0].mxu0 %v421
      %v584 = vpop.f32.mrb[0].mxu0
      %v585 = vadd.f32 0.0, %v584
      %v586 = vpop.f32.mrb[0].mxu0
      %v587 = vpop.f32.mrb[0].mxu0
      %v588 = vadd.f32 0.0, %v587
      %v589 = vpop.f32.mrb[0].mxu0
      %590 = vmatprep.mubr.bf16.mxu0 0
      %591 = vmatmul.mubr.bf16.gmra.mrb[0].mxu0 %v424
      %v592 = vpop.f32.mrb[0].mxu0
      %v593 = vadd.f32 0.0, %v592
      %v594 = vpop.f32.mrb[0].mxu0
      %v595 = vpop.f32.mrb[0].mxu0
      %v596 = vadd.f32 0.0, %v595
      %v597 = vpop.f32.mrb[0].mxu0
      %598 = vmatprep.mubr.bf16.mxu0 0
      %599 = vmatmul.mubr.bf16.gmra.mrb[0].mxu0 %v427
      %v600 = vpop.f32.mrb[0].mxu0
      %v601 = vadd.f32 0.0, %v600
      %v602 = vpop.f32.mrb[0].mxu0
      %v603 = vpop.f32.mrb[0].mxu0
      %v604 = vadd.f32 0.0, %v603
      %v605 = vpop.f32.mrb[0].mxu0
      %606 = vmatprep.mubr.bf16.mxu0 0
      %607 = vmatmul.mubr.bf16.gmra.mrb[0].mxu0 %v430
      %v608 = vpop.f32.mrb[0].mxu0
      %v609 = vadd.f32 0.0, %v608
      %v610 = vpop.f32.mrb[0].mxu0
      %v611 = vpop.f32.mrb[0].mxu0
      %v612 = vadd.f32 0.0, %v611
      %v613 = vpop.f32.mrb[0].mxu0
      %614 = vmatprep.mubr.bf16.mxu0 0
      %615 = vmatmul.mubr.bf16.gmra.mrb[0].mxu0 %v433
      %v616 = vpop.f32.mrb[0].mxu0
      %v617 = vadd.f32 0.0, %v616
      %v618 = vpop.f32.mrb[0].mxu0
      %v619 = vpop.f32.mrb[0].mxu0
      %v620 = vadd.f32 0.0, %v619
      %v621 = vpop.f32.mrb[0].mxu0
      %622 = vmatprep.mubr.bf16.mxu0 0
      %623 = vmatmul.mubr.bf16.gmra.mrb[0].mxu0 %v436
      %v624 = vpop.f32.mrb[0].mxu0
      %v625 = vadd.f32 0.0, %v624
      %v626 = vpop.f32.mrb[0].mxu0
      %v627 = vpop.f32.mrb[0].mxu0
      %v628 = vadd.f32 0.0, %v627
      %v629 = vpop.f32.mrb[0].mxu0
      %630 = vmatprep.mubr.bf16.mxu0 0
      %631 = vmatmul.mubr.bf16.gmra.mrb[0].mxu0 %v439
      %v632 = vpop.f32.mrb[0].mxu0
      %v633 = vadd.f32 0.0, %v632
      %v634 = vpop.f32.mrb[0].mxu0
      %v635 = vpop.f32.mrb[0].mxu0
      %v636 = vadd.f32 0.0, %v635
      %v637 = vpop.f32.mrb[0].mxu0
      %638 = vmatprep.mubr.bf16.mxu0 0
      %639 = vmatmul.mubr.bf16.gmra.mrb[0].mxu0 %v442
      %v640 = vpop.f32.mrb[0].mxu0
      %v641 = vadd.f32 0.0, %v640
      %v642 = vpop.f32.mrb[0].mxu0
      %v643 = vpop.f32.mrb[0].mxu0
      %v644 = vadd.f32 0.0, %v643
      %v645 = vpop.f32.mrb[0].mxu0
      %646 = vmatprep.mubr.bf16.mxu0 0
      %647 = vmatmul.mubr.bf16.gmra.mrb[0].mxu0 %v445
      %v648 = vpop.f32.mrb[0].mxu0
      %v649 = vadd.f32 0.0, %v648
      %v650 = vpop.f32.mrb[0].mxu0
      %v651 = vpop.f32.mrb[0].mxu0
      %v652 = vadd.f32 0.0, %v651
      %v653 = vpop.f32.mrb[0].mxu0
      %654 = vmatprep.mubr.bf16.mxu0 0
      %655 = vmatmul.mubr.bf16.gmra.mrb[0].mxu0 %v448
      %v656 = vpop.f32.mrb[0].mxu0
      %v657 = vadd.f32 0.0, %v656
      %v658 = vpop.f32.mrb[0].mxu0
      %v659 = vpop.f32.mrb[0].mxu0
      %v660 = vadd.f32 0.0, %v659
      %v661 = vpop.f32.mrb[0].mxu0
      %662 = vmatprep.mubr.bf16.mxu0 0
      %663 = vmatmul.mubr.bf16.gmra.mrb[0].mxu0 %v451
      %v664 = vpop.f32.mrb[0].mxu0
      %v665 = vadd.f32 0.0, %v664
      %v666 = vpop.f32.mrb[0].mxu0
      %v667 = vpop.f32.mrb[0].mxu0
      %v668 = vadd.f32 0.0, %v667
      %v669 = vpop.f32.mrb[0].mxu0
      %670 = vmatprep.mubr.bf16.mxu0 0
      %671 = vmatmul.mubr.bf16.gmra.mrb[0].mxu0 %v454
      %v672 = vpop.f32.mrb[0].mxu0
      %v673 = vadd.f32 0.0, %v672
      %v674 = vpop.f32.mrb[0].mxu0
      %v675 = vpop.f32.mrb[0].mxu0
      %v676 = vadd.f32 0.0, %v675
      %v677 = vpop.f32.mrb[0].mxu0
      %678 = vmatprep.mubr.bf16.mxu0 0
      %679 = vmatmul.mubr.bf16.gmra.mrb[0].mxu0 %v457
      %v680 = vpop.f32.mrb[0].mxu0
      %v681 = vadd.f32 0.0, %v680
      %v682 = vpop.f32.mrb[0].mxu0
      %v683 = vpop.f32.mrb[0].mxu0
      %v684 = vadd.f32 0.0, %v683
      %v685 = vpop.f32.mrb[0].mxu0
      %686 = vmatprep.mubr.bf16.mxu0 0
      %687 = vmatmul.mubr.bf16.gmra.mrb[0].mxu0 %v460
      %v688 = vpop.f32.mrb[0].mxu0
      %v689 = vadd.f32 0.0, %v688
      %v690 = vpop.f32.mrb[0].mxu0
      %v691 = vpop.f32.mrb[0].mxu0
      %v692 = vadd.f32 0.0, %v691
      %v693 = vpop.f32.mrb[0].mxu0
      %694 = vmatprep.mubr.bf16.mxu0 0
      %695 = vmatmul.mubr.bf16.gmra.mrb[0].mxu0 %v463
      %v696 = vpop.f32.mrb[0].mxu0
      %v697 = vadd.f32 0.0, %v696
      %v698 = vpop.f32.mrb[0].mxu0
      %v699 = vpop.f32.mrb[0].mxu0
      %v700 = vadd.f32 0.0, %v699
      %v701 = vpop.f32.mrb[0].mxu0
      %702 = vmatprep.mubr.bf16.mxu0 0
      %703 = vmatmul.mubr.bf16.gmra.mrb[0].mxu0 %v466
      %v704 = vpop.f32.mrb[0].mxu0
      %v705 = vadd.f32 0.0, %v704
      %v706 = vpop.f32.mrb[0].mxu0
      %v707 = vpop.f32.mrb[0].mxu0
      %v708 = vadd.f32 0.0, %v707
      %v709 = vpop.f32.mrb[0].mxu0
      %710 = vmatprep.mubr.bf16.mxu0 0
      %711 = vmatmul.mubr.bf16.gmra.mrb[0].mxu0 %v469
      %v712 = vpop.f32.mrb[0].mxu0
      %v713 = vadd.f32 0.0, %v712
      %v714 = vpop.f32.mrb[0].mxu0
      %v715 = vpop.f32.mrb[0].mxu0
      %v716 = vadd.f32 0.0, %v715
      %v717 = vpop.f32.mrb[0].mxu0
      %718 = vmatprep.mubr.bf16.mxu0 0
      %719 = vmatmul.mubr.bf16.gmra.mrb[0].mxu0 %v472
      %v720 = vpop.f32.mrb[0].mxu0
      %v721 = vadd.f32 0.0, %v720
      %v722 = vpop.f32.mrb[0].mxu0
      %v723 = vpop.f32.mrb[0].mxu0
      %v724 = vadd.f32 0.0, %v723
      %v725 = vpop.f32.mrb[0].mxu0
      %726 = vmatprep.mubr.bf16.mxu0 0
      %727 = vmatmul.mubr.bf16.gmra.mrb[0].mxu0 %v475
      %v728 = vpop.f32.mrb[0].mxu0
      %v729 = vadd.f32 0.0, %v728
      %v730 = vpop.f32.mrb[0].mxu0
      %v731 = vpop.f32.mrb[0].mxu0
      %v732 = vadd.f32 0.0, %v731
      %v733 = vpop.f32.mrb[0].mxu0
      %734 = vmatprep.mubr.bf16.mxu0 0
      %735 = vmatmul.mubr.bf16.gmra.mrb[0].mxu0 %v478
      %v736 = vpop.f32.mrb[0].mxu0
      %v737 = vadd.f32 0.0, %v736
      %v738 = vpop.f32.mrb[0].mxu0
      %v739 = vpop.f32.mrb[0].mxu0
      %v740 = vadd.f32 0.0, %v739
      %v741 = vpop.f32.mrb[0].mxu0
      %742 = vmatprep.mubr.bf16.mxu0 0
      %743 = vmatmul.mubr.bf16.gmra.mrb[0].mxu0 %v481
      %v744 = vpop.f32.mrb[0].mxu0
      %v745 = vadd.f32 0.0, %v744
      %v746 = vpop.f32.mrb[0].mxu0
      %v747 = vpop.f32.mrb[0].mxu0
      %v748 = vadd.f32 0.0, %v747
      %v749 = vpop.f32.mrb[0].mxu0
      %750 = vmatprep.mubr.bf16.mxu0 0
      %751 = vmatmul.mubr.bf16.gmra.mrb[0].mxu0 %v484
      %v752 = vpop.f32.mrb[0].mxu0
      %v753 = vadd.f32 0.0, %v752
      %v754 = vpop.f32.mrb[0].mxu0
      %v755 = vpop.f32.mrb[0].mxu0
      %v756 = vadd.f32 0.0, %v755
      %v757 = vpop.f32.mrb[0].mxu0
      %758 = vmatprep.mubr.bf16.mxu0 0
      %759 = vmatmul.mubr.bf16.gmra.mrb[0].mxu0 %v487
      %v760 = vpop.f32.mrb[0].mxu0
      %v761 = vadd.f32 0.0, %v760
      %v762 = vpop.f32.mrb[0].mxu0
      %v763 = vpop.f32.mrb[0].mxu0
      %v764 = vadd.f32 0.0, %v763
      %v765 = vpop.f32.mrb[0].mxu0
      %766 = vmatprep.mubr.bf16.mxu0 0
      %767 = vmatmul.mubr.bf16.gmra.mrb[0].mxu0 %v490
      %v768 = vpop.f32.mrb[0].mxu0
      %v769 = vadd.f32 0.0, %v768
      %v770 = vpop.f32.mrb[0].mxu0
      %v771 = vpop.f32.mrb[0].mxu0
      %v772 = vadd.f32 0.0, %v771
      %v773 = vpop.f32.mrb[0].mxu0
      %774 = vmatprep.mubr.bf16.mxu0 0
      %775 = vmatmul.mubr.bf16.gmra.mrb[0].mxu0 %v493
      %v776 = vpop.f32.mrb[0].mxu0
      %v777 = vadd.f32 0.0, %v776
      %v778 = vpop.f32.mrb[0].mxu0
      %v779 = vpop.f32.mrb[0].mxu0
      %v780 = vadd.f32 0.0, %v779
      %v781 = vpop.f32.mrb[0].mxu0
      %782 = vmatprep.mubr.bf16.mxu0 0
      %783 = vmatmul.mubr.bf16.gmra.mrb[0].mxu0 %v496
      %v784 = vpop.f32.mrb[0].mxu0
      %v785 = vadd.f32 0.0, %v784
      %v786 = vpop.f32.mrb[0].mxu0
      %v787 = vpop.f32.mrb[0].mxu0
      %v788 = vadd.f32 0.0, %v787
      %v789 = vpop.f32.mrb[0].mxu0
      %790 = vdwg.mxu0
      %p791 = scmp.eq.s32.totalorder %s15, 0
      // Predicated region
      $region29: #{decoder_forward.2} parent=27 // pred_check
        %p792 = pneg %p791
      $region30: #{decoder_forward.2} parent=27 // pred_check_branch
        %794 = sbr.rel (%p792) target = $region32
      $region31: #{decoder_forward.2} parent=27 // pred_region
        %795 = vst [vmem:[%s2] sm:$0x1] 0.0
        %796 = vst [vmem:[%s3] sm:$0x1] 0.0
      $region32: #{decoder_forward.2} parent=27 // pred_fallthru
        _
      %v797 = vld [vmem:[%s2] sm:$0x1]
      %v798 = vadd.f32 %v537, %v540
      %v799 = vadd.f32 %v798, %v545
      %v800 = vadd.f32 %v799, %v548
      %v801 = vadd.f32 %v800, %v553
      %v802 = vadd.f32 %v801, %v556
      %v803 = vadd.f32 %v802, %v561
      %v804 = vadd.f32 %v803, %v564
      %v805 = vadd.f32 %v804, %v569
      %v806 = vadd.f32 %v805, %v572
      %v807 = vadd.f32 %v806, %v577
      %v808 = vadd.f32 %v807, %v580
      %v809 = vadd.f32 %v808, %v585
      %v810 = vadd.f32 %v809, %v588
      %v811 = vadd.f32 %v810, %v593
      %v812 = vadd.f32 %v811, %v596
      %v813 = vadd.f32 %v812, %v601
      %v814 = vadd.f32 %v813, %v604
      %v815 = vadd.f32 %v814, %v609
      %v816 = vadd.f32 %v815, %v612
      %v817 = vadd.f32 %v816, %v617
      %v818 = vadd.f32 %v817, %v620
      %v819 = vadd.f32 %v818, %v625
      %v820 = vadd.f32 %v819, %v628
      %v821 = vadd.f32 %v820, %v633
      %v822 = vadd.f32 %v821, %v636
      %v823 = vadd.f32 %v822, %v641
      %v824 = vadd.f32 %v823, %v644
      %v825 = vadd.f32 %v824, %v649
      %v826 = vadd.f32 %v825, %v652
      %v827 = vadd.f32 %v826, %v657
      %v828 = vadd.f32 %v827, %v660
      %v829 = vadd.f32 %v828, %v665
      %v830 = vadd.f32 %v829, %v668
      %v831 = vadd.f32 %v830, %v673
      %v832 = vadd.f32 %v831, %v676
      %v833 = vadd.f32 %v832, %v681
      %v834 = vadd.f32 %v833, %v684
      %v835 = vadd.f32 %v834, %v689
      %v836 = vadd.f32 %v835, %v692
      %v837 = vadd.f32 %v836, %v697
      %v838 = vadd.f32 %v837, %v700
      %v839 = vadd.f32 %v838, %v705
      %v840 = vadd.f32 %v839, %v708
      %v841 = vadd.f32 %v840, %v713
      %v842 = vadd.f32 %v841, %v716
      %v843 = vadd.f32 %v842, %v721
      %v844 = vadd.f32 %v843, %v724
      %v845 = vadd.f32 %v844, %v729
      %v846 = vadd.f32 %v845, %v732
      %v847 = vadd.f32 %v846, %v737
      %v848 = vadd.f32 %v847, %v740
      %v849 = vadd.f32 %v848, %v745
      %v850 = vadd.f32 %v849, %v748
      %v851 = vadd.f32 %v850, %v753
      %v852 = vadd.f32 %v851, %v756
      %v853 = vadd.f32 %v852, %v761
      %v854 = vadd.f32 %v853, %v764
      %v855 = vadd.f32 %v854, %v769
      %v856 = vadd.f32 %v855, %v772
      %v857 = vadd.f32 %v856, %v777
      %v858 = vadd.f32 %v857, %v780
      %v859 = vadd.f32 %v858, %v785
      %v860 = vadd.f32 %v859, %v788
      %v861 = vrot.slane %v860, 4
      %v862 = vadd.f32 %v860, %v861
      %v863 = vrot.slane %v862, 2
      %v864 = vadd.f32 %v862, %v863
      %v865 = vrot.slane %v864, 1
      %v866 = vadd.f32 %v864, %v865
      %v867 = vadd.f32 %v797, %v866
      %868 = vst [vmem:[%s2] sm:$0x1] %v867
      %v869 = vld [vmem:[%s3] sm:$0x1]
      %v870 = vmul.f32 %v537, %v537
      %v871 = vmul.f32 %v540, %v540
      %v872 = vmul.f32 %v545, %v545
      %v873 = vmul.f32 %v548, %v548
      %v874 = vmul.f32 %v553, %v553
      %v875 = vmul.f32 %v556, %v556
      %v876 = vmul.f32 %v561, %v561
      %v877 = vmul.f32 %v564, %v564
      %v878 = vmul.f32 %v569, %v569
      %v879 = vmul.f32 %v572, %v572
      %v880 = vmul.f32 %v577, %v577
      %v881 = vmul.f32 %v580, %v580
      %v882 = vmul.f32 %v585, %v585
      %v883 = vmul.f32 %v588, %v588
      %v884 = vmul.f32 %v593, %v593
      %v885 = vmul.f32 %v596, %v596
      %v886 = vmul.f32 %v601, %v601
      %v887 = vmul.f32 %v604, %v604
      %v888 = vmul.f32 %v609, %v609
      %v889 = vmul.f32 %v612, %v612
      %v890 = vmul.f32 %v617, %v617
      %v891 = vmul.f32 %v620, %v620
      %v892 = vmul.f32 %v625, %v625
      %v893 = vmul.f32 %v628, %v628
      %v894 = vmul.f32 %v633, %v633
      %v895 = vmul.f32 %v636, %v636
      %v896 = vmul.f32 %v641, %v641
      %v897 = vmul.f32 %v644, %v644
      %v898 = vmul.f32 %v649, %v649
      %v899 = vmul.f32 %v652, %v652
      %v900 = vmul.f32 %v657, %v657
      %v901 = vmul.f32 %v660, %v660
      %v902 = vmul.f32 %v665, %v665
      %v903 = vmul.f32 %v668, %v668
      %v904 = vmul.f32 %v673, %v673
      %v905 = vmul.f32 %v676, %v676
      %v906 = vmul.f32 %v681, %v681
      %v907 = vmul.f32 %v684, %v684
      %v908 = vmul.f32 %v689, %v689
      %v909 = vmul.f32 %v692, %v692
      %v910 = vmul.f32 %v697, %v697
      %v911 = vmul.f32 %v700, %v700
      %v912 = vmul.f32 %v705, %v705
      %v913 = vmul.f32 %v708, %v708
      %v914 = vmul.f32 %v713, %v713
      %v915 = vmul.f32 %v716, %v716
      %v916 = vmul.f32 %v721, %v721
      %v917 = vmul.f32 %v724, %v724
      %v918 = vmul.f32 %v729, %v729
      %v919 = vmul.f32 %v732, %v732
      %v920 = vmul.f32 %v737, %v737
      %v921 = vmul.f32 %v740, %v740
      %v922 = vmul.f32 %v745, %v745
      %v923 = vmul.f32 %v748, %v748
      %v924 = vmul.f32 %v753, %v753
      %v925 = vmul.f32 %v756, %v756
      %v926 = vmul.f32 %v761, %v761
      %v927 = vmul.f32 %v764, %v764
      %v928 = vmul.f32 %v769, %v769
      %v929 = vmul.f32 %v772, %v772
      %v930 = vmul.f32 %v777, %v777
      %v931 = vmul.f32 %v780, %v780
      %v932 = vmul.f32 %v785, %v785
      %v933 = vmul.f32 %v788, %v788
      %v934 = vadd.f32 %v870, %v871
      %v935 = vadd.f32 %v934, %v872
      %v936 = vadd.f32 %v935, %v873
      %v937 = vadd.f32 %v936, %v874
      %v938 = vadd.f32 %v937, %v875
      %v939 = vadd.f32 %v938, %v876
      %v940 = vadd.f32 %v939, %v877
      %v941 = vadd.f32 %v940, %v878
      %v942 = vadd.f32 %v941, %v879
      %v943 = vadd.f32 %v942, %v880
      %v944 = vadd.f32 %v943, %v881
      %v945 = vadd.f32 %v944, %v882
      %v946 = vadd.f32 %v945, %v883
      %v947 = vadd.f32 %v946, %v884
      %v948 = vadd.f32 %v947, %v885
      %v949 = vadd.f32 %v948, %v886
      %v950 = vadd.f32 %v949, %v887
      %v951 = vadd.f32 %v950, %v888
      %v952 = vadd.f32 %v951, %v889
      %v953 = vadd.f32 %v952, %v890
      %v954 = vadd.f32 %v953, %v891
      %v955 = vadd.f32 %v954, %v892
      %v956 = vadd.f32 %v955, %v893
      %v957 = vadd.f32 %v956, %v894
      %v958 = vadd.f32 %v957, %v895
      %v959 = vadd.f32 %v958, %v896
      %v960 = vadd.f32 %v959, %v897
      %v961 = vadd.f32 %v960, %v898
      %v962 = vadd.f32 %v961, %v899
      %v963 = vadd.f32 %v962, %v900
      %v964 = vadd.f32 %v963, %v901
      %v965 = vadd.f32 %v964, %v902
      %v966 = vadd.f32 %v965, %v903
      %v967 = vadd.f32 %v966, %v904
      %v968 = vadd.f32 %v967, %v905
      %v969 = vadd.f32 %v968, %v906
      %v970 = vadd.f32 %v969, %v907
      %v971 = vadd.f32 %v970, %v908
      %v972 = vadd.f32 %v971, %v909
      %v973 = vadd.f32 %v972, %v910
      %v974 = vadd.f32 %v973, %v911
      %v975 = vadd.f32 %v974, %v912
      %v976 = vadd.f32 %v975, %v913
      %v977 = vadd.f32 %v976, %v914
      %v978 = vadd.f32 %v977, %v915
      %v979 = vadd.f32 %v978, %v916
      %v980 = vadd.f32 %v979, %v917
      %v981 = vadd.f32 %v980, %v918
      %v982 = vadd.f32 %v981, %v919
      %v983 = vadd.f32 %v982, %v920
      %v984 = vadd.f32 %v983, %v921
      %v985 = vadd.f32 %v984, %v922
      %v986 = vadd.f32 %v985, %v923
      %v987 = vadd.f32 %v986, %v924
      %v988 = vadd.f32 %v987, %v925
      %v989 = vadd.f32 %v988, %v926
      %v990 = vadd.f32 %v989, %v927
      %v991 = vadd.f32 %v990, %v928
      %v992 = vadd.f32 %v991, %v929
      %v993 = vadd.f32 %v992, %v930
      %v994 = vadd.f32 %v993, %v931
      %v995 = vadd.f32 %v994, %v932
      %v996 = vadd.f32 %v995, %v933
      %v997 = vrot.slane %v996, 4
      %v998 = vadd.f32 %v996, %v997
      %v999 = vrot.slane %v998, 2
      %v1000 = vadd.f32 %v998, %v999
      %v1001 = vrot.slane %v1000, 1
      %v1002 = vadd.f32 %v1000, %v1001
      %v1003 = vadd.f32 %v869, %v1002
      %1004 = vst [vmem:[%s3] sm:$0x1] %v1003
      // Predicated region
      $region33: #{decoder_forward.2} parent=27 // pred_check
        %p1005 = pneg %p75
      $region34: #{decoder_forward.2} parent=27 // pred_check_branch
        %1007 = sbr.rel (%p1005) target = $region36
      $region35: #{decoder_forward.2} parent=27 // pred_region
        _
      $region36: #{decoder_forward.2} parent=27 // pred_fallthru
        _
      // Predicated region
      $region37: #{decoder_forward.2} parent=27 // pred_check
        %p1008 = pneg %p96
      $region38: #{decoder_forward.2} parent=27 // pred_check_branch
        %1010 = sbr.rel (%p1008) target = $region40
      $region39: #{decoder_forward.2} parent=27 // pred_region
        _
      $region40: #{decoder_forward.2} parent=27 // pred_fallthru
        _
      // Predicated region
      $region41: #{decoder_forward.2} parent=27 // pred_check
        %p1011 = pneg %p75
      $region42: #{decoder_forward.2} parent=27 // pred_check_branch
        %1013 = sbr.rel (%p1011) target = $region44
      $region43: #{decoder_forward.2} parent=27 // pred_region
        _
      $region44: #{decoder_forward.2} parent=27 // pred_fallthru
        _
      // Predicated region
      $region45: #{decoder_forward.2} parent=27 // pred_check
        %p1014 = pneg %p96
      $region46: #{decoder_forward.2} parent=27 // pred_check_branch
        %1016 = sbr.rel (%p1014) target = $region48
      $region47: #{decoder_forward.2} parent=27 // pred_region
        _
      $region48: #{decoder_forward.2} parent=27 // pred_fallthru
        _
    $region28: #{decoder_forward.2} parent=5 // pred_fallthru
      _
    %p1017 = scmp.le.s32.totalorder 2, %s10
    // Predicated region
    $region49: #{decoder_forward.2} parent=5 // pred_check
      %p1018 = pneg %p1017
    $region50: #{decoder_forward.2} parent=5 // pred_check_branch
      %1020 = sbr.rel (%p1018) target = $region52
    $region51: #{decoder_forward.2} parent=5 // pred_region
      %s1021 = ssub.s32 %s10, 2
    $region52: #{decoder_forward.2} parent=5 // pred_fallthru
      _
  $region6: #{decoder_forward.2} parent=0 // loop_footer
    %s14 = sadd.s32 1, %s10
  $region7: #{decoder_forward.2} parent=0 // loop_footer_branch
    %9 = sbr.rel target = $region3
  $region8: #{decoder_forward.2} parent=0 // loop_exit
    _

</llo_original>
